<compile_context>
chip_gen: v5e
topology: v5e:2x2
jax: 0.10.0
libtpu: 0.0.40
codegen_flags: <defaults>
</compile_context>

<pallas_src>
import functools

import jax
import jax.numpy as jnp
import numpy as np
from jax import lax
from jax.experimental import pallas as pl
from jax.experimental.pallas import tpu as pltpu


# ----------------------------------------------------------------------------
# Fused bidirectional LSTM + per-direction half of the final Linear layer
# ----------------------------------------------------------------------------
def _bilstm_kernel(x_ref, wih_ref, whh_ref, b_ref, wl_ref, z_ref,
                   gx_scr, hblk_scr, h_scr, c_scr,
                   *, hidden, block_t, batch_pad, x_resident, unroll):
    H, TT, B = hidden, block_t, batch_pad
    N = TT * B
    d = pl.program_id(0)                 # 0 = forward, 1 = backward
    tb = pl.program_id(1)                # monotone time-block step
    n_tb = pl.num_programs(1)
    tb_true = (1 - d) * tb + d * (n_tb - 1 - tb)   # true time-block index

    @pl.when(tb == 0)
    def _():
        h_scr[...] = jnp.zeros_like(h_scr)
        c_scr[...] = jnp.zeros_like(c_scr)

    # Hoisted input projection for the whole block: one lane-dense MXU matmul.
    if x_resident:
        row0 = pl.multiple_of(tb_true * N, 8)     # N is a multiple of 8
        x_blk = x_ref[pl.ds(row0, N), :]          # x resident in VMEM, sliced here
    else:
        x_blk = x_ref[...]                        # per-block DMA'd tile
    gx_scr[...] = (jnp.dot(x_blk, wih_ref[0],
                           preferred_element_type=jnp.float32) + b_ref[0])

    whh = whh_ref[0]                              # (H, 4H), hoisted out of the loop

    def step(s, carry):
        h_prev, c_prev = carry
        # In-block time index; backward direction walks the block in reverse.
        tau = (1 - d) * s + d * (TT - 1 - s)
        row = pl.multiple_of(tau * B, 8)          # B padded to a multiple of 8
        gates = gx_scr[pl.ds(row, B), :] + jnp.dot(
            h_prev.astype(whh.dtype), whh, preferred_element_type=jnp.float32)
        # PyTorch gate order: i, f, g, o.
        i = jax.nn.sigmoid(gates[:, 0 * H:1 * H])
        f = jax.nn.sigmoid(gates[:, 1 * H:2 * H])
        g = jnp.tanh(gates[:, 2 * H:3 * H])
        o = jax.nn.sigmoid(gates[:, 3 * H:4 * H])
        c_new = f * c_prev + i * g
        h_new = o * jnp.tanh(c_new)
        hblk_scr[pl.ds(row, B), :] = h_new        # stored at true time position
        return h_new, c_new

    h_last, c_last = lax.fori_loop(0, TT, step, (h_scr[...], c_scr[...]),
                                   unroll=unroll)
    h_scr[...] = h_last
    c_scr[...] = c_last

    # Fused half of Linear(2H, 1): lane-dense (1, N) partial logits for this block.
    # One transpose + skinny matmul per block; hidden states never leave VMEM.
    r = jnp.dot(wl_ref[0], hblk_scr[...].T, preferred_element_type=jnp.float32)
    z_ref[0, pl.ds(tb_true, 1), :] = r            # z stays resident across time


# ----------------------------------------------------------------------------
# VMEM-budget-aware planning
# ----------------------------------------------------------------------------
def _vmem_budget_bytes():
    try:
        cap = int(pltpu.get_tpu_info().vmem_capacity_bytes)
    except Exception:
        cap = 64 * 1024 * 1024        # conservative (v7x-sized) fallback
    return (cap * 3) // 4             # leave headroom for compiler scratch


def _plan_blocks(T, B_pad, F, H, in_bytes, budget):
    """Pick time-block length TT (divides T) and whether x stays VMEM-resident."""
    def fits(tt, x_res):
        w = 2 * (in_bytes * 4 * H * (F + H) + 4 * 5 * H)      # dbl-buffered weights
        x = 2 * (T if x_res else tt) * B_pad * F * in_bytes   # dbl-buffered x
        scr = 4 * tt * B_pad * 5 * H + 2 * 4 * B_pad * H      # gx + hblk + h + c
        z = 2 * T * B_pad * 4                                 # resident z output
        return w + x + scr + z <= budget

    divisors = [tt for tt in range(min(T, 256), 0, -1) if T % tt == 0]
    best = {res: next((tt for tt in divisors if fits(tt, res)), None)
            for res in (True, False)}
    # Prefer keeping x resident unless it forces a much smaller time block.
    if best[True] is not None and best[True] * 4 >= (best[False] or 1):
        return best[True], True
    if best[False] is not None:
        return best[False], False
    return 1, False


# ----------------------------------------------------------------------------
def discriminator_forward(x_btf, params, *, use_bf16_matmul=False):
    """x_btf: (B, T, n_mels) -> (B, T, 1), matching the PyTorch module."""
    f32 = jnp.float32
    mm_dt = jnp.bfloat16 if use_bf16_matmul else f32   # MXU-operand dtype (gated)
    B, T, F = x_btf.shape
    H = params["w_hh_f"].shape[1]
    B_pad = -(-B // 8) * 8                             # sublane-align the batch

    budget = _vmem_budget_bytes()
    TT, x_resident = _plan_blocks(T, B_pad, F, H, jnp.dtype(mm_dt).itemsize, budget)
    assert T % TT == 0
    nTB = T // TT
    N = TT * B_pad

    # Time-major, batch-padded rows: row t*B_pad + b holds x[b, t, :].
    # TODO(synk): for strictly mem-bound cases this wrapper transpose is one extra
    # HBM round trip of x; a batch-major strided in-kernel read would remove it.
    x_t = jnp.transpose(x_btf, (1, 0, 2))
    if B_pad != B:
        x_t = jnp.pad(x_t, ((0, 0), (0, B_pad - B), (0, 0)))
    x_flat = x_t.reshape(T * B_pad, F).astype(mm_dt)

    # Per-direction parameters stacked on a leading axis (0 = fwd, 1 = bwd).
    wih = jnp.stack([jnp.asarray(params["w_ih_f"], f32).T,
                     jnp.asarray(params["w_ih_b"], f32).T]).astype(mm_dt)  # (2,F,4H)
    whh = jnp.stack([jnp.asarray(params["w_hh_f"], f32).T,
                     jnp.asarray(params["w_hh_b"], f32).T]).astype(mm_dt)  # (2,H,4H)
    b = jnp.stack([
        (jnp.asarray(params["b_ih_f"], f32)
         + jnp.asarray(params["b_hh_f"], f32)).reshape(1, 4 * H),
        (jnp.asarray(params["b_ih_b"], f32)
         + jnp.asarray(params["b_hh_b"], f32)).reshape(1, 4 * H),
    ])                                                                     # (2,1,4H)
    w_lin = jnp.asarray(params["w_lin"], f32)                              # (1, 2H)
    wl = jnp.stack([w_lin[:, :H], w_lin[:, H:]])                           # (2, 1, H)

    def tblock(di, ti):   # block-level time reversal for the backward direction
        return (1 - di) * ti + di * (nTB - 1 - ti)

    if x_resident:
        x_spec = pl.BlockSpec((T * B_pad, F), lambda di, ti: (0, 0))
    else:
        x_spec = pl.BlockSpec((N, F), lambda di, ti: (tblock(di, ti), 0))

    kernel = functools.partial(
        _bilstm_kernel, hidden=H, block_t=TT, batch_pad=B_pad,
        x_resident=x_resident, unroll=min(TT, 8))

    z = pl.pallas_call(
        kernel,
        out_shape=jax.ShapeDtypeStruct((2, nTB, N), f32),
        grid_spec=pltpu.PrefetchScalarGridSpec(
            num_scalar_prefetch=0,
            grid=(2, nTB),
            in_specs=[
                x_spec,
                pl.BlockSpec((1, F, 4 * H), lambda di, ti: (di, 0, 0)),
                pl.BlockSpec((1, H, 4 * H), lambda di, ti: (di, 0, 0)),
                pl.BlockSpec((1, 1, 4 * H), lambda di, ti: (di, 0, 0)),
                pl.BlockSpec((1, 1, H), lambda di, ti: (di, 0, 0)),
            ],
            # z is resident per direction; one contiguous HBM writeback per d.
            out_specs=pl.BlockSpec((1, nTB, N), lambda di, ti: (di, 0, 0)),
            scratch_shapes=[
                pltpu.VMEM((N, 4 * H), f32),    # hoisted input-projection gates
                pltpu.VMEM((N, H), f32),        # hidden states of the block
                pltpu.VMEM((B_pad, H), f32),    # h carry across time blocks
                pltpu.VMEM((B_pad, H), f32),    # c carry across time blocks
            ],
        ),
        compiler_params=pltpu.CompilerParams(
            dimension_semantics=("parallel", "arbitrary"),
            vmem_limit_bytes=int(budget)),
    )(x_flat, wih, whh, b, wl)                                      # (2, nTB, N)

    # Combine partial logits + bias and apply sigmoid in plain JAX (XLA fuses it;
    # cheaper than a second width-1 pallas_call).
    zt = z.reshape(2, nTB, TT, B_pad)[:, :, :, :B].reshape(2, T, B)
    y = jax.nn.sigmoid(zt[0] + zt[1] + jnp.asarray(params["b_lin"], f32))
    return jnp.transpose(y, (1, 0))[:, :, None]                     # (B, T, 1)


# ----------------------------------------------------------------------------
# Pure-JAX reference (for correctness check)
# ----------------------------------------------------------------------------
def _lstm_ref(x_tbf, w_ih, w_hh, b_ih, b_hh, reverse):
    T, B, F = x_tbf.shape
    H = w_hh.shape[1]
    xs = x_tbf[::-1] if reverse else x_tbf

    def step(carry, x_t):
        h, c = carry
        gates = x_t @ w_ih.T + h @ w_hh.T + b_ih + b_hh
        i, f, g, o = jnp.split(gates, 4, axis=-1)
        i, f, o = jax.nn.sigmoid(i), jax.nn.sigmoid(f), jax.nn.sigmoid(o)
        g = jnp.tanh(g)
        c = f * c + i * g
        h = o * jnp.tanh(c)
        return (h, c), h

    init = (jnp.zeros((B, H), jnp.float32), jnp.zeros((B, H), jnp.float32))
    _, hs = lax.scan(step, init, xs)
    return hs[::-1] if reverse else hs


def _reference_forward(x_btf, params):
    x_tbf = jnp.transpose(x_btf, (1, 0, 2)).astype(jnp.float32)
    h_f = _lstm_ref(x_tbf, params["w_ih_f"], params["w_hh_f"],
                    params["b_ih_f"], params["b_hh_f"], reverse=False)
    h_b = _lstm_ref(x_tbf, params["w_ih_b"], params["w_hh_b"],
                    params["b_ih_b"], params["b_hh_b"], reverse=True)
    h = jnp.concatenate([h_f, h_b], axis=-1)          # (T, B, 2H)
    h = jnp.transpose(h, (1, 0, 2))                   # (B, T, 2H)
    return jax.nn.sigmoid(h @ params["w_lin"].T + params["b_lin"])


# ----------------------------------------------------------------------------
def init_params(key, n_mels, lstm_dim):
    """Deterministic init matching PyTorch LSTM/Linear shapes (uniform(-k, k))."""
    H = lstm_dim
    k_lstm = 1.0 / np.sqrt(H)
    k_lin = 1.0 / np.sqrt(2 * H)
    keys = jax.random.split(key, 10)
    u = lambda kk, shp, k: jax.random.uniform(kk, shp, jnp.float32, -k, k)
    return {
        "w_ih_f": u(keys[0], (4 * H, n_mels), k_lstm),
        "w_hh_f": u(keys[1], (4 * H, H), k_lstm),
        "b_ih_f": u(keys[2], (4 * H,), k_lstm),
        "b_hh_f": u(keys[3], (4 * H,), k_lstm),
        "w_ih_b": u(keys[4], (4 * H, n_mels), k_lstm),
        "w_hh_b": u(keys[5], (4 * H, H), k_lstm),
        "b_ih_b": u(keys[6], (4 * H,), k_lstm),
        "b_hh_b": u(keys[7], (4 * H,), k_lstm),
        "w_lin": u(keys[8], (1, 2 * H), k_lin),
        "b_lin": u(keys[9], (1,), k_lin),
    }


if __name__ == "__main__":
    B, T, N_MELS, LSTM_DIM = 2, 8, 16, 32

    root = jax.random.PRNGKey(0)
    k_x, k_p = jax.random.split(root)
    x = jax.random.normal(k_x, (B, T, N_MELS), jnp.float32)
    params = init_params(k_p, N_MELS, LSTM_DIM)

    y = jax.block_until_ready(discriminator_forward(x, params))
    y_ref = jax.block_until_ready(_reference_forward(x, params))

    assert y.shape == (B, T, 1), y.shape
    np.testing.assert_allclose(np.asarray(y), np.asarray(y_ref),
                               rtol=1e-5, atol=1e-5)
    print("KERNEL_OK")
</pallas_src>

<mosaic_0001>
module attributes {stable_mosaic.version = 11 : i64} {
  func.func @_bilstm_kernel(%arg0: i32, %arg1: i32, %arg2: memref<64x16xf32, #tpu.memory_space<vmem>>, %arg3: memref<1x16x128xf32, #tpu.memory_space<vmem>>, %arg4: memref<1x32x128xf32, #tpu.memory_space<vmem>>, %arg5: memref<1x1x128xf32, #tpu.memory_space<vmem>>, %arg6: memref<1x1x32xf32, #tpu.memory_space<vmem>>, %arg7: memref<1x1x64xf32, #tpu.memory_space<vmem>>, %arg8: memref<64x128xf32, #tpu.memory_space<vmem>>, %arg9: memref<64x32xf32, #tpu.memory_space<vmem>>, %arg10: memref<8x32xf32, #tpu.memory_space<vmem>>, %arg11: memref<8x32xf32, #tpu.memory_space<vmem>>) attributes {dimension_semantics = [#tpu.dimension_semantics<parallel>, #tpu.dimension_semantics<arbitrary>], iteration_bounds = array<i64: 2, 1>, scalar_prefetch = 0 : i64, scratch_operands = 4 : i64, tpu.core_type = #tpu.core_type<tc>, window_params = [{pipeline_mode = #tpu.pipeline_mode<synchronous>, transform_indices = @transform_0, window_bounds = array<i64: 64, 16>}, {transform_indices = @transform_1, window_bounds = array<i64: 1, 16, 128>}, {transform_indices = @transform_2, window_bounds = array<i64: 1, 32, 128>}, {transform_indices = @transform_3, window_bounds = array<i64: 1, 1, 128>}, {transform_indices = @transform_4, window_bounds = array<i64: 1, 1, 32>}, {transform_indices = @transform_5, window_bounds = array<i64: 1, 1, 64>}]} {
    %c1_i32 = arith.constant 1 : i32
    %0 = arith.subi %c1_i32, %arg0 : i32
    %1 = arith.muli %0, %arg1 : i32
    %c0_i32 = arith.constant 0 : i32
    %2 = arith.subi %c0_i32, %arg1 : i32
    %3 = arith.muli %arg0, %2 : i32
    %4 = arith.addi %1, %3 : i32
    %c0_i32_0 = arith.constant 0 : i32
    %5 = arith.cmpi eq, %arg1, %c0_i32_0 : i32
    %6 = arith.extui %5 : i1 to i32
    %c0_i32_1 = arith.constant 0 : i32
    %7 = arith.cmpi ne, %6, %c0_i32_1 : i32
    scf.if %7 {
      %cst_103 = arith.constant 0.000000e+00 : f32
      %339 = vector.broadcast %cst_103 : f32 to vector<8x32xf32>
      %c0_104 = arith.constant 0 : index
      %c0_105 = arith.constant 0 : index
      %340 = vector.load %arg10[%c0_104, %c0_105] : memref<8x32xf32, #tpu.memory_space<vmem>>, vector<8x32xf32>
      tpu.vector_store %arg10[%c0_104, %c0_105], %339 {strides = array<i32>} : memref<8x32xf32, #tpu.memory_space<vmem>>, vector<8x32xf32>,
      %cst_106 = arith.constant 0.000000e+00 : f32
      %341 = vector.broadcast %cst_106 : f32 to vector<8x32xf32>
      %c0_107 = arith.constant 0 : index
      %c0_108 = arith.constant 0 : index
      %342 = vector.load %arg11[%c0_107, %c0_108] : memref<8x32xf32, #tpu.memory_space<vmem>>, vector<8x32xf32>
      tpu.vector_store %arg11[%c0_107, %c0_108], %341 {strides = array<i32>} : memref<8x32xf32, #tpu.memory_space<vmem>>, vector<8x32xf32>,
    } else {
    }
    %c64_i32 = arith.constant 64 : i32
    %8 = arith.muli %4, %c64_i32 : i32
    %9 = tpu.assume_multiple %8, 8 : i32
    %10 = arith.index_cast %9 : i32 to index
    %c0 = arith.constant 0 : index
    %11 = vector.load %arg2[%10, %c0] : memref<64x16xf32, #tpu.memory_space<vmem>>, vector<64x16xf32>
    %c0_2 = arith.constant 0 : index
    %c0_3 = arith.constant 0 : index
    %c0_4 = arith.constant 0 : index
    %12 = vector.load %arg3[%c0_2, %c0_3, %c0_4] : memref<1x16x128xf32, #tpu.memory_space<vmem>>, vector<1x16x128xf32>
    %13 = vector.shape_cast %12 : vector<1x16x128xf32> to vector<16x128xf32>
    %cst = arith.constant dense<0.000000e+00> : vector<64x128xf32>
    %14 = tpu.matmul %11, %13, %cst {dimension_numbers = #tpu.dot_dimension_numbers<[1], [0], [0], [1], [0, 0, 1, 1], [], []>} : vector<64x16xf32>, vector<16x128xf32>, vector<64x128xf32> -> vector<64x128xf32>
    %c0_5 = arith.constant 0 : index
    %c0_6 = arith.constant 0 : index
    %c0_7 = arith.constant 0 : index
    %15 = vector.load %arg5[%c0_5, %c0_6, %c0_7] : memref<1x1x128xf32, #tpu.memory_space<vmem>>, vector<1x1x128xf32>
    %16 = vector.shape_cast %15 : vector<1x1x128xf32> to vector<1x128xf32>
    %17 = vector.broadcast %16 : vector<1x128xf32> to vector<64x128xf32>
    %18 = arith.addf %14, %17 : vector<64x128xf32>
    %c0_8 = arith.constant 0 : index
    %c0_9 = arith.constant 0 : index
    %19 = vector.load %arg8[%c0_8, %c0_9] : memref<64x128xf32, #tpu.memory_space<vmem>>, vector<64x128xf32>
    tpu.vector_store %arg8[%c0_8, %c0_9], %18 {strides = array<i32>} : memref<64x128xf32, #tpu.memory_space<vmem>>, vector<64x128xf32>,
    %c0_10 = arith.constant 0 : index
    %c0_11 = arith.constant 0 : index
    %c0_12 = arith.constant 0 : index
    %20 = vector.load %arg4[%c0_10, %c0_11, %c0_12] : memref<1x32x128xf32, #tpu.memory_space<vmem>>, vector<1x32x128xf32>
    %21 = vector.shape_cast %20 : vector<1x32x128xf32> to vector<32x128xf32>
    %c0_13 = arith.constant 0 : index
    %c0_14 = arith.constant 0 : index
    %22 = vector.load %arg10[%c0_13, %c0_14] : memref<8x32xf32, #tpu.memory_space<vmem>>, vector<8x32xf32>
    %c0_15 = arith.constant 0 : index
    %c0_16 = arith.constant 0 : index
    %23 = vector.load %arg11[%c0_15, %c0_16] : memref<8x32xf32, #tpu.memory_space<vmem>>, vector<8x32xf32>
    %c0_i32_17 = arith.constant 0 : i32
    %c1_i32_18 = arith.constant 1 : i32
    %24 = arith.subi %c1_i32_18, %arg0 : i32
    %25 = arith.muli %24, %c0_i32_17 : i32
    %c7_i32 = arith.constant 7 : i32
    %26 = arith.subi %c7_i32, %c0_i32_17 : i32
    %27 = arith.muli %arg0, %26 : i32
    %28 = arith.addi %25, %27 : i32
    %c8_i32 = arith.constant 8 : i32
    %29 = arith.muli %28, %c8_i32 : i32
    %30 = tpu.assume_multiple %29, 8 : i32
    %31 = arith.index_cast %30 : i32 to index
    %c0_19 = arith.constant 0 : index
    %32 = vector.load %arg8[%31, %c0_19] : memref<64x128xf32, #tpu.memory_space<vmem>>, vector<8x128xf32>
    %cst_20 = arith.constant dense<0.000000e+00> : vector<8x128xf32>
    %33 = tpu.matmul %22, %21, %cst_20 {dimension_numbers = #tpu.dot_dimension_numbers<[1], [0], [0], [1], [0, 0, 1, 1], [], []>} : vector<8x32xf32>, vector<32x128xf32>, vector<8x128xf32> -> vector<8x128xf32>
    %34 = arith.addf %32, %33 : vector<8x128xf32>
    %35 = vector.extract_strided_slice %34 {offsets = [0, 0], sizes = [8, 32], strides = [1, 1]} : vector<8x128xf32> to vector<8x32xf32>
    %36 = arith.negf %35 : vector<8x32xf32>
    %37 = math.exp %36 : vector<8x32xf32>
    %cst_21 = arith.constant 1.000000e+00 : f32
    %38 = vector.broadcast %cst_21 : f32 to vector<8x32xf32>
    %39 = arith.addf %38, %37 : vector<8x32xf32>
    %40 = arith.divf %38, %39 : vector<8x32xf32>
    %41 = vector.extract_strided_slice %34 {offsets = [0, 32], sizes = [8, 32], strides = [1, 1]} : vector<8x128xf32> to vector<8x32xf32>
    %42 = arith.negf %41 : vector<8x32xf32>
    %43 = math.exp %42 : vector<8x32xf32>
    %cst_22 = arith.constant 1.000000e+00 : f32
    %44 = vector.broadcast %cst_22 : f32 to vector<8x32xf32>
    %45 = arith.addf %44, %43 : vector<8x32xf32>
    %46 = arith.divf %44, %45 : vector<8x32xf32>
    %47 = vector.extract_strided_slice %34 {offsets = [0, 64], sizes = [8, 32], strides = [1, 1]} : vector<8x128xf32> to vector<8x32xf32>
    %48 = math.tanh %47 : vector<8x32xf32>
    %49 = vector.extract_strided_slice %34 {offsets = [0, 96], sizes = [8, 32], strides = [1, 1]} : vector<8x128xf32> to vector<8x32xf32>
    %50 = arith.negf %49 : vector<8x32xf32>
    %51 = math.exp %50 : vector<8x32xf32>
    %cst_23 = arith.constant 1.000000e+00 : f32
    %52 = vector.broadcast %cst_23 : f32 to vector<8x32xf32>
    %53 = arith.addf %52, %51 : vector<8x32xf32>
    %54 = arith.divf %52, %53 : vector<8x32xf32>
    %55 = arith.mulf %46, %23 : vector<8x32xf32>
    %56 = arith.mulf %40, %48 : vector<8x32xf32>
    %57 = arith.addf %55, %56 : vector<8x32xf32>
    %58 = math.tanh %57 : vector<8x32xf32>
    %59 = arith.mulf %54, %58 : vector<8x32xf32>
    %60 = arith.index_cast %30 : i32 to index
    %c0_24 = arith.constant 0 : index
    %61 = vector.load %arg9[%60, %c0_24] : memref<64x32xf32, #tpu.memory_space<vmem>>, vector<8x32xf32>
    tpu.vector_store %arg9[%60, %c0_24], %59 {strides = array<i32>} : memref<64x32xf32, #tpu.memory_space<vmem>>, vector<8x32xf32>,
    %c1_i32_25 = arith.constant 1 : i32
    %c1_i32_26 = arith.constant 1 : i32
    %62 = arith.subi %c1_i32_26, %arg0 : i32
    %63 = arith.muli %62, %c1_i32_25 : i32
    %c7_i32_27 = arith.constant 7 : i32
    %64 = arith.subi %c7_i32_27, %c1_i32_25 : i32
    %65 = arith.muli %arg0, %64 : i32
    %66 = arith.addi %63, %65 : i32
    %c8_i32_28 = arith.constant 8 : i32
    %67 = arith.muli %66, %c8_i32_28 : i32
    %68 = tpu.assume_multiple %67, 8 : i32
    %69 = arith.index_cast %68 : i32 to index
    %c0_29 = arith.constant 0 : index
    %70 = vector.load %arg8[%69, %c0_29] : memref<64x128xf32, #tpu.memory_space<vmem>>, vector<8x128xf32>
    %cst_30 = arith.constant dense<0.000000e+00> : vector<8x128xf32>
    %71 = tpu.matmul %59, %21, %cst_30 {dimension_numbers = #tpu.dot_dimension_numbers<[1], [0], [0], [1], [0, 0, 1, 1], [], []>} : vector<8x32xf32>, vector<32x128xf32>, vector<8x128xf32> -> vector<8x128xf32>
    %72 = arith.addf %70, %71 : vector<8x128xf32>
    %73 = vector.extract_strided_slice %72 {offsets = [0, 0], sizes = [8, 32], strides = [1, 1]} : vector<8x128xf32> to vector<8x32xf32>
    %74 = arith.negf %73 : vector<8x32xf32>
    %75 = math.exp %74 : vector<8x32xf32>
    %cst_31 = arith.constant 1.000000e+00 : f32
    %76 = vector.broadcast %cst_31 : f32 to vector<8x32xf32>
    %77 = arith.addf %76, %75 : vector<8x32xf32>
    %78 = arith.divf %76, %77 : vector<8x32xf32>
    %79 = vector.extract_strided_slice %72 {offsets = [0, 32], sizes = [8, 32], strides = [1, 1]} : vector<8x128xf32> to vector<8x32xf32>
    %80 = arith.negf %79 : vector<8x32xf32>
    %81 = math.exp %80 : vector<8x32xf32>
    %cst_32 = arith.constant 1.000000e+00 : f32
    %82 = vector.broadcast %cst_32 : f32 to vector<8x32xf32>
    %83 = arith.addf %82, %81 : vector<8x32xf32>
    %84 = arith.divf %82, %83 : vector<8x32xf32>
    %85 = vector.extract_strided_slice %72 {offsets = [0, 64], sizes = [8, 32], strides = [1, 1]} : vector<8x128xf32> to vector<8x32xf32>
    %86 = math.tanh %85 : vector<8x32xf32>
    %87 = vector.extract_strided_slice %72 {offsets = [0, 96], sizes = [8, 32], strides = [1, 1]} : vector<8x128xf32> to vector<8x32xf32>
    %88 = arith.negf %87 : vector<8x32xf32>
    %89 = math.exp %88 : vector<8x32xf32>
    %cst_33 = arith.constant 1.000000e+00 : f32
    %90 = vector.broadcast %cst_33 : f32 to vector<8x32xf32>
    %91 = arith.addf %90, %89 : vector<8x32xf32>
    %92 = arith.divf %90, %91 : vector<8x32xf32>
    %93 = arith.mulf %84, %57 : vector<8x32xf32>
    %94 = arith.mulf %78, %86 : vector<8x32xf32>
    %95 = arith.addf %93, %94 : vector<8x32xf32>
    %96 = math.tanh %95 : vector<8x32xf32>
    %97 = arith.mulf %92, %96 : vector<8x32xf32>
    %98 = arith.index_cast %68 : i32 to index
    %c0_34 = arith.constant 0 : index
    %99 = vector.load %arg9[%98, %c0_34] : memref<64x32xf32, #tpu.memory_space<vmem>>, vector<8x32xf32>
    tpu.vector_store %arg9[%98, %c0_34], %97 {strides = array<i32>} : memref<64x32xf32, #tpu.memory_space<vmem>>, vector<8x32xf32>,
    %c2_i32 = arith.constant 2 : i32
    %c1_i32_35 = arith.constant 1 : i32
    %100 = arith.subi %c1_i32_35, %arg0 : i32
    %101 = arith.muli %100, %c2_i32 : i32
    %c7_i32_36 = arith.constant 7 : i32
    %102 = arith.subi %c7_i32_36, %c2_i32 : i32
    %103 = arith.muli %arg0, %102 : i32
    %104 = arith.addi %101, %103 : i32
    %c8_i32_37 = arith.constant 8 : i32
    %105 = arith.muli %104, %c8_i32_37 : i32
    %106 = tpu.assume_multiple %105, 8 : i32
    %107 = arith.index_cast %106 : i32 to index
    %c0_38 = arith.constant 0 : index
    %108 = vector.load %arg8[%107, %c0_38] : memref<64x128xf32, #tpu.memory_space<vmem>>, vector<8x128xf32>
    %cst_39 = arith.constant dense<0.000000e+00> : vector<8x128xf32>
    %109 = tpu.matmul %97, %21, %cst_39 {dimension_numbers = #tpu.dot_dimension_numbers<[1], [0], [0], [1], [0, 0, 1, 1], [], []>} : vector<8x32xf32>, vector<32x128xf32>, vector<8x128xf32> -> vector<8x128xf32>
    %110 = arith.addf %108, %109 : vector<8x128xf32>
    %111 = vector.extract_strided_slice %110 {offsets = [0, 0], sizes = [8, 32], strides = [1, 1]} : vector<8x128xf32> to vector<8x32xf32>
    %112 = arith.negf %111 : vector<8x32xf32>
    %113 = math.exp %112 : vector<8x32xf32>
    %cst_40 = arith.constant 1.000000e+00 : f32
    %114 = vector.broadcast %cst_40 : f32 to vector<8x32xf32>
    %115 = arith.addf %114, %113 : vector<8x32xf32>
    %116 = arith.divf %114, %115 : vector<8x32xf32>
    %117 = vector.extract_strided_slice %110 {offsets = [0, 32], sizes = [8, 32], strides = [1, 1]} : vector<8x128xf32> to vector<8x32xf32>
    %118 = arith.negf %117 : vector<8x32xf32>
    %119 = math.exp %118 : vector<8x32xf32>
    %cst_41 = arith.constant 1.000000e+00 : f32
    %120 = vector.broadcast %cst_41 : f32 to vector<8x32xf32>
    %121 = arith.addf %120, %119 : vector<8x32xf32>
    %122 = arith.divf %120, %121 : vector<8x32xf32>
    %123 = vector.extract_strided_slice %110 {offsets = [0, 64], sizes = [8, 32], strides = [1, 1]} : vector<8x128xf32> to vector<8x32xf32>
    %124 = math.tanh %123 : vector<8x32xf32>
    %125 = vector.extract_strided_slice %110 {offsets = [0, 96], sizes = [8, 32], strides = [1, 1]} : vector<8x128xf32> to vector<8x32xf32>
    %126 = arith.negf %125 : vector<8x32xf32>
    %127 = math.exp %126 : vector<8x32xf32>
    %cst_42 = arith.constant 1.000000e+00 : f32
    %128 = vector.broadcast %cst_42 : f32 to vector<8x32xf32>
    %129 = arith.addf %128, %127 : vector<8x32xf32>
    %130 = arith.divf %128, %129 : vector<8x32xf32>
    %131 = arith.mulf %122, %95 : vector<8x32xf32>
    %132 = arith.mulf %116, %124 : vector<8x32xf32>
    %133 = arith.addf %131, %132 : vector<8x32xf32>
    %134 = math.tanh %133 : vector<8x32xf32>
    %135 = arith.mulf %130, %134 : vector<8x32xf32>
    %136 = arith.index_cast %106 : i32 to index
    %c0_43 = arith.constant 0 : index
    %137 = vector.load %arg9[%136, %c0_43] : memref<64x32xf32, #tpu.memory_space<vmem>>, vector<8x32xf32>
    tpu.vector_store %arg9[%136, %c0_43], %135 {strides = array<i32>} : memref<64x32xf32, #tpu.memory_space<vmem>>, vector<8x32xf32>,
    %c3_i32 = arith.constant 3 : i32
    %c1_i32_44 = arith.constant 1 : i32
    %138 = arith.subi %c1_i32_44, %arg0 : i32
    %139 = arith.muli %138, %c3_i32 : i32
    %c7_i32_45 = arith.constant 7 : i32
    %140 = arith.subi %c7_i32_45, %c3_i32 : i32
    %141 = arith.muli %arg0, %140 : i32
    %142 = arith.addi %139, %141 : i32
    %c8_i32_46 = arith.constant 8 : i32
    %143 = arith.muli %142, %c8_i32_46 : i32
    %144 = tpu.assume_multiple %143, 8 : i32
    %145 = arith.index_cast %144 : i32 to index
    %c0_47 = arith.constant 0 : index
    %146 = vector.load %arg8[%145, %c0_47] : memref<64x128xf32, #tpu.memory_space<vmem>>, vector<8x128xf32>
    %cst_48 = arith.constant dense<0.000000e+00> : vector<8x128xf32>
    %147 = tpu.matmul %135, %21, %cst_48 {dimension_numbers = #tpu.dot_dimension_numbers<[1], [0], [0], [1], [0, 0, 1, 1], [], []>} : vector<8x32xf32>, vector<32x128xf32>, vector<8x128xf32> -> vector<8x128xf32>
    %148 = arith.addf %146, %147 : vector<8x128xf32>
    %149 = vector.extract_strided_slice %148 {offsets = [0, 0], sizes = [8, 32], strides = [1, 1]} : vector<8x128xf32> to vector<8x32xf32>
    %150 = arith.negf %149 : vector<8x32xf32>
    %151 = math.exp %150 : vector<8x32xf32>
    %cst_49 = arith.constant 1.000000e+00 : f32
    %152 = vector.broadcast %cst_49 : f32 to vector<8x32xf32>
    %153 = arith.addf %152, %151 : vector<8x32xf32>
    %154 = arith.divf %152, %153 : vector<8x32xf32>
    %155 = vector.extract_strided_slice %148 {offsets = [0, 32], sizes = [8, 32], strides = [1, 1]} : vector<8x128xf32> to vector<8x32xf32>
    %156 = arith.negf %155 : vector<8x32xf32>
    %157 = math.exp %156 : vector<8x32xf32>
    %cst_50 = arith.constant 1.000000e+00 : f32
    %158 = vector.broadcast %cst_50 : f32 to vector<8x32xf32>
    %159 = arith.addf %158, %157 : vector<8x32xf32>
    %160 = arith.divf %158, %159 : vector<8x32xf32>
    %161 = vector.extract_strided_slice %148 {offsets = [0, 64], sizes = [8, 32], strides = [1, 1]} : vector<8x128xf32> to vector<8x32xf32>
    %162 = math.tanh %161 : vector<8x32xf32>
    %163 = vector.extract_strided_slice %148 {offsets = [0, 96], sizes = [8, 32], strides = [1, 1]} : vector<8x128xf32> to vector<8x32xf32>
    %164 = arith.negf %163 : vector<8x32xf32>
    %165 = math.exp %164 : vector<8x32xf32>
    %cst_51 = arith.constant 1.000000e+00 : f32
    %166 = vector.broadcast %cst_51 : f32 to vector<8x32xf32>
    %167 = arith.addf %166, %165 : vector<8x32xf32>
    %168 = arith.divf %166, %167 : vector<8x32xf32>
    %169 = arith.mulf %160, %133 : vector<8x32xf32>
    %170 = arith.mulf %154, %162 : vector<8x32xf32>
    %171 = arith.addf %169, %170 : vector<8x32xf32>
    %172 = math.tanh %171 : vector<8x32xf32>
    %173 = arith.mulf %168, %172 : vector<8x32xf32>
    %174 = arith.index_cast %144 : i32 to index
    %c0_52 = arith.constant 0 : index
    %175 = vector.load %arg9[%174, %c0_52] : memref<64x32xf32, #tpu.memory_space<vmem>>, vector<8x32xf32>
    tpu.vector_store %arg9[%174, %c0_52], %173 {strides = array<i32>} : memref<64x32xf32, #tpu.memory_space<vmem>>, vector<8x32xf32>,
    %c4_i32 = arith.constant 4 : i32
    %c1_i32_53 = arith.constant 1 : i32
    %176 = arith.subi %c1_i32_53, %arg0 : i32
    %177 = arith.muli %176, %c4_i32 : i32
    %c7_i32_54 = arith.constant 7 : i32
    %178 = arith.subi %c7_i32_54, %c4_i32 : i32
    %179 = arith.muli %arg0, %178 : i32
    %180 = arith.addi %177, %179 : i32
    %c8_i32_55 = arith.constant 8 : i32
    %181 = arith.muli %180, %c8_i32_55 : i32
    %182 = tpu.assume_multiple %181, 8 : i32
    %183 = arith.index_cast %182 : i32 to index
    %c0_56 = arith.constant 0 : index
    %184 = vector.load %arg8[%183, %c0_56] : memref<64x128xf32, #tpu.memory_space<vmem>>, vector<8x128xf32>
    %cst_57 = arith.constant dense<0.000000e+00> : vector<8x128xf32>
    %185 = tpu.matmul %173, %21, %cst_57 {dimension_numbers = #tpu.dot_dimension_numbers<[1], [0], [0], [1], [0, 0, 1, 1], [], []>} : vector<8x32xf32>, vector<32x128xf32>, vector<8x128xf32> -> vector<8x128xf32>
    %186 = arith.addf %184, %185 : vector<8x128xf32>
    %187 = vector.extract_strided_slice %186 {offsets = [0, 0], sizes = [8, 32], strides = [1, 1]} : vector<8x128xf32> to vector<8x32xf32>
    %188 = arith.negf %187 : vector<8x32xf32>
    %189 = math.exp %188 : vector<8x32xf32>
    %cst_58 = arith.constant 1.000000e+00 : f32
    %190 = vector.broadcast %cst_58 : f32 to vector<8x32xf32>
    %191 = arith.addf %190, %189 : vector<8x32xf32>
    %192 = arith.divf %190, %191 : vector<8x32xf32>
    %193 = vector.extract_strided_slice %186 {offsets = [0, 32], sizes = [8, 32], strides = [1, 1]} : vector<8x128xf32> to vector<8x32xf32>
    %194 = arith.negf %193 : vector<8x32xf32>
    %195 = math.exp %194 : vector<8x32xf32>
    %cst_59 = arith.constant 1.000000e+00 : f32
    %196 = vector.broadcast %cst_59 : f32 to vector<8x32xf32>
    %197 = arith.addf %196, %195 : vector<8x32xf32>
    %198 = arith.divf %196, %197 : vector<8x32xf32>
    %199 = vector.extract_strided_slice %186 {offsets = [0, 64], sizes = [8, 32], strides = [1, 1]} : vector<8x128xf32> to vector<8x32xf32>
    %200 = math.tanh %199 : vector<8x32xf32>
    %201 = vector.extract_strided_slice %186 {offsets = [0, 96], sizes = [8, 32], strides = [1, 1]} : vector<8x128xf32> to vector<8x32xf32>
    %202 = arith.negf %201 : vector<8x32xf32>
    %203 = math.exp %202 : vector<8x32xf32>
    %cst_60 = arith.constant 1.000000e+00 : f32
    %204 = vector.broadcast %cst_60 : f32 to vector<8x32xf32>
    %205 = arith.addf %204, %203 : vector<8x32xf32>
    %206 = arith.divf %204, %205 : vector<8x32xf32>
    %207 = arith.mulf %198, %171 : vector<8x32xf32>
    %208 = arith.mulf %192, %200 : vector<8x32xf32>
    %209 = arith.addf %207, %208 : vector<8x32xf32>
    %210 = math.tanh %209 : vector<8x32xf32>
    %211 = arith.mulf %206, %210 : vector<8x32xf32>
    %212 = arith.index_cast %182 : i32 to index
    %c0_61 = arith.constant 0 : index
    %213 = vector.load %arg9[%212, %c0_61] : memref<64x32xf32, #tpu.memory_space<vmem>>, vector<8x32xf32>
    tpu.vector_store %arg9[%212, %c0_61], %211 {strides = array<i32>} : memref<64x32xf32, #tpu.memory_space<vmem>>, vector<8x32xf32>,
    %c5_i32 = arith.constant 5 : i32
    %c1_i32_62 = arith.constant 1 : i32
    %214 = arith.subi %c1_i32_62, %arg0 : i32
    %215 = arith.muli %214, %c5_i32 : i32
    %c7_i32_63 = arith.constant 7 : i32
    %216 = arith.subi %c7_i32_63, %c5_i32 : i32
    %217 = arith.muli %arg0, %216 : i32
    %218 = arith.addi %215, %217 : i32
    %c8_i32_64 = arith.constant 8 : i32
    %219 = arith.muli %218, %c8_i32_64 : i32
    %220 = tpu.assume_multiple %219, 8 : i32
    %221 = arith.index_cast %220 : i32 to index
    %c0_65 = arith.constant 0 : index
    %222 = vector.load %arg8[%221, %c0_65] : memref<64x128xf32, #tpu.memory_space<vmem>>, vector<8x128xf32>
    %cst_66 = arith.constant dense<0.000000e+00> : vector<8x128xf32>
    %223 = tpu.matmul %211, %21, %cst_66 {dimension_numbers = #tpu.dot_dimension_numbers<[1], [0], [0], [1], [0, 0, 1, 1], [], []>} : vector<8x32xf32>, vector<32x128xf32>, vector<8x128xf32> -> vector<8x128xf32>
    %224 = arith.addf %222, %223 : vector<8x128xf32>
    %225 = vector.extract_strided_slice %224 {offsets = [0, 0], sizes = [8, 32], strides = [1, 1]} : vector<8x128xf32> to vector<8x32xf32>
    %226 = arith.negf %225 : vector<8x32xf32>
    %227 = math.exp %226 : vector<8x32xf32>
    %cst_67 = arith.constant 1.000000e+00 : f32
    %228 = vector.broadcast %cst_67 : f32 to vector<8x32xf32>
    %229 = arith.addf %228, %227 : vector<8x32xf32>
    %230 = arith.divf %228, %229 : vector<8x32xf32>
    %231 = vector.extract_strided_slice %224 {offsets = [0, 32], sizes = [8, 32], strides = [1, 1]} : vector<8x128xf32> to vector<8x32xf32>
    %232 = arith.negf %231 : vector<8x32xf32>
    %233 = math.exp %232 : vector<8x32xf32>
    %cst_68 = arith.constant 1.000000e+00 : f32
    %234 = vector.broadcast %cst_68 : f32 to vector<8x32xf32>
    %235 = arith.addf %234, %233 : vector<8x32xf32>
    %236 = arith.divf %234, %235 : vector<8x32xf32>
    %237 = vector.extract_strided_slice %224 {offsets = [0, 64], sizes = [8, 32], strides = [1, 1]} : vector<8x128xf32> to vector<8x32xf32>
    %238 = math.tanh %237 : vector<8x32xf32>
    %239 = vector.extract_strided_slice %224 {offsets = [0, 96], sizes = [8, 32], strides = [1, 1]} : vector<8x128xf32> to vector<8x32xf32>
    %240 = arith.negf %239 : vector<8x32xf32>
    %241 = math.exp %240 : vector<8x32xf32>
    %cst_69 = arith.constant 1.000000e+00 : f32
    %242 = vector.broadcast %cst_69 : f32 to vector<8x32xf32>
    %243 = arith.addf %242, %241 : vector<8x32xf32>
    %244 = arith.divf %242, %243 : vector<8x32xf32>
    %245 = arith.mulf %236, %209 : vector<8x32xf32>
    %246 = arith.mulf %230, %238 : vector<8x32xf32>
    %247 = arith.addf %245, %246 : vector<8x32xf32>
    %248 = math.tanh %247 : vector<8x32xf32>
    %249 = arith.mulf %244, %248 : vector<8x32xf32>
    %250 = arith.index_cast %220 : i32 to index
    %c0_70 = arith.constant 0 : index
    %251 = vector.load %arg9[%250, %c0_70] : memref<64x32xf32, #tpu.memory_space<vmem>>, vector<8x32xf32>
    tpu.vector_store %arg9[%250, %c0_70], %249 {strides = array<i32>} : memref<64x32xf32, #tpu.memory_space<vmem>>, vector<8x32xf32>,
    %c6_i32 = arith.constant 6 : i32
    %c1_i32_71 = arith.constant 1 : i32
    %252 = arith.subi %c1_i32_71, %arg0 : i32
    %253 = arith.muli %252, %c6_i32 : i32
    %c7_i32_72 = arith.constant 7 : i32
    %254 = arith.subi %c7_i32_72, %c6_i32 : i32
    %255 = arith.muli %arg0, %254 : i32
    %256 = arith.addi %253, %255 : i32
    %c8_i32_73 = arith.constant 8 : i32
    %257 = arith.muli %256, %c8_i32_73 : i32
    %258 = tpu.assume_multiple %257, 8 : i32
    %259 = arith.index_cast %258 : i32 to index
    %c0_74 = arith.constant 0 : index
    %260 = vector.load %arg8[%259, %c0_74] : memref<64x128xf32, #tpu.memory_space<vmem>>, vector<8x128xf32>
    %cst_75 = arith.constant dense<0.000000e+00> : vector<8x128xf32>
    %261 = tpu.matmul %249, %21, %cst_75 {dimension_numbers = #tpu.dot_dimension_numbers<[1], [0], [0], [1], [0, 0, 1, 1], [], []>} : vector<8x32xf32>, vector<32x128xf32>, vector<8x128xf32> -> vector<8x128xf32>
    %262 = arith.addf %260, %261 : vector<8x128xf32>
    %263 = vector.extract_strided_slice %262 {offsets = [0, 0], sizes = [8, 32], strides = [1, 1]} : vector<8x128xf32> to vector<8x32xf32>
    %264 = arith.negf %263 : vector<8x32xf32>
    %265 = math.exp %264 : vector<8x32xf32>
    %cst_76 = arith.constant 1.000000e+00 : f32
    %266 = vector.broadcast %cst_76 : f32 to vector<8x32xf32>
    %267 = arith.addf %266, %265 : vector<8x32xf32>
    %268 = arith.divf %266, %267 : vector<8x32xf32>
    %269 = vector.extract_strided_slice %262 {offsets = [0, 32], sizes = [8, 32], strides = [1, 1]} : vector<8x128xf32> to vector<8x32xf32>
    %270 = arith.negf %269 : vector<8x32xf32>
    %271 = math.exp %270 : vector<8x32xf32>
    %cst_77 = arith.constant 1.000000e+00 : f32
    %272 = vector.broadcast %cst_77 : f32 to vector<8x32xf32>
    %273 = arith.addf %272, %271 : vector<8x32xf32>
    %274 = arith.divf %272, %273 : vector<8x32xf32>
    %275 = vector.extract_strided_slice %262 {offsets = [0, 64], sizes = [8, 32], strides = [1, 1]} : vector<8x128xf32> to vector<8x32xf32>
    %276 = math.tanh %275 : vector<8x32xf32>
    %277 = vector.extract_strided_slice %262 {offsets = [0, 96], sizes = [8, 32], strides = [1, 1]} : vector<8x128xf32> to vector<8x32xf32>
    %278 = arith.negf %277 : vector<8x32xf32>
    %279 = math.exp %278 : vector<8x32xf32>
    %cst_78 = arith.constant 1.000000e+00 : f32
    %280 = vector.broadcast %cst_78 : f32 to vector<8x32xf32>
    %281 = arith.addf %280, %279 : vector<8x32xf32>
    %282 = arith.divf %280, %281 : vector<8x32xf32>
    %283 = arith.mulf %274, %247 : vector<8x32xf32>
    %284 = arith.mulf %268, %276 : vector<8x32xf32>
    %285 = arith.addf %283, %284 : vector<8x32xf32>
    %286 = math.tanh %285 : vector<8x32xf32>
    %287 = arith.mulf %282, %286 : vector<8x32xf32>
    %288 = arith.index_cast %258 : i32 to index
    %c0_79 = arith.constant 0 : index
    %289 = vector.load %arg9[%288, %c0_79] : memref<64x32xf32, #tpu.memory_space<vmem>>, vector<8x32xf32>
    tpu.vector_store %arg9[%288, %c0_79], %287 {strides = array<i32>} : memref<64x32xf32, #tpu.memory_space<vmem>>, vector<8x32xf32>,
    %c7_i32_80 = arith.constant 7 : i32
    %c1_i32_81 = arith.constant 1 : i32
    %290 = arith.subi %c1_i32_81, %arg0 : i32
    %291 = arith.muli %290, %c7_i32_80 : i32
    %c7_i32_82 = arith.constant 7 : i32
    %292 = arith.subi %c7_i32_82, %c7_i32_80 : i32
    %293 = arith.muli %arg0, %292 : i32
    %294 = arith.addi %291, %293 : i32
    %c8_i32_83 = arith.constant 8 : i32
    %295 = arith.muli %294, %c8_i32_83 : i32
    %296 = tpu.assume_multiple %295, 8 : i32
    %297 = arith.index_cast %296 : i32 to index
    %c0_84 = arith.constant 0 : index
    %298 = vector.load %arg8[%297, %c0_84] : memref<64x128xf32, #tpu.memory_space<vmem>>, vector<8x128xf32>
    %cst_85 = arith.constant dense<0.000000e+00> : vector<8x128xf32>
    %299 = tpu.matmul %287, %21, %cst_85 {dimension_numbers = #tpu.dot_dimension_numbers<[1], [0], [0], [1], [0, 0, 1, 1], [], []>} : vector<8x32xf32>, vector<32x128xf32>, vector<8x128xf32> -> vector<8x128xf32>
    %300 = arith.addf %298, %299 : vector<8x128xf32>
    %301 = vector.extract_strided_slice %300 {offsets = [0, 0], sizes = [8, 32], strides = [1, 1]} : vector<8x128xf32> to vector<8x32xf32>
    %302 = arith.negf %301 : vector<8x32xf32>
    %303 = math.exp %302 : vector<8x32xf32>
    %cst_86 = arith.constant 1.000000e+00 : f32
    %304 = vector.broadcast %cst_86 : f32 to vector<8x32xf32>
    %305 = arith.addf %304, %303 : vector<8x32xf32>
    %306 = arith.divf %304, %305 : vector<8x32xf32>
    %307 = vector.extract_strided_slice %300 {offsets = [0, 32], sizes = [8, 32], strides = [1, 1]} : vector<8x128xf32> to vector<8x32xf32>
    %308 = arith.negf %307 : vector<8x32xf32>
    %309 = math.exp %308 : vector<8x32xf32>
    %cst_87 = arith.constant 1.000000e+00 : f32
    %310 = vector.broadcast %cst_87 : f32 to vector<8x32xf32>
    %311 = arith.addf %310, %309 : vector<8x32xf32>
    %312 = arith.divf %310, %311 : vector<8x32xf32>
    %313 = vector.extract_strided_slice %300 {offsets = [0, 64], sizes = [8, 32], strides = [1, 1]} : vector<8x128xf32> to vector<8x32xf32>
    %314 = math.tanh %313 : vector<8x32xf32>
    %315 = vector.extract_strided_slice %300 {offsets = [0, 96], sizes = [8, 32], strides = [1, 1]} : vector<8x128xf32> to vector<8x32xf32>
    %316 = arith.negf %315 : vector<8x32xf32>
    %317 = math.exp %316 : vector<8x32xf32>
    %cst_88 = arith.constant 1.000000e+00 : f32
    %318 = vector.broadcast %cst_88 : f32 to vector<8x32xf32>
    %319 = arith.addf %318, %317 : vector<8x32xf32>
    %320 = arith.divf %318, %319 : vector<8x32xf32>
    %321 = arith.mulf %312, %285 : vector<8x32xf32>
    %322 = arith.mulf %306, %314 : vector<8x32xf32>
    %323 = arith.addf %321, %322 : vector<8x32xf32>
    %324 = math.tanh %323 : vector<8x32xf32>
    %325 = arith.mulf %320, %324 : vector<8x32xf32>
    %326 = arith.index_cast %296 : i32 to index
    %c0_89 = arith.constant 0 : index
    %327 = vector.load %arg9[%326, %c0_89] : memref<64x32xf32, #tpu.memory_space<vmem>>, vector<8x32xf32>
    tpu.vector_store %arg9[%326, %c0_89], %325 {strides = array<i32>} : memref<64x32xf32, #tpu.memory_space<vmem>>, vector<8x32xf32>,
    %c8_i32_90 = arith.constant 8 : i32
    %c0_91 = arith.constant 0 : index
    %c0_92 = arith.constant 0 : index
    %328 = vector.load %arg10[%c0_91, %c0_92] : memref<8x32xf32, #tpu.memory_space<vmem>>, vector<8x32xf32>
    tpu.vector_store %arg10[%c0_91, %c0_92], %325 {strides = array<i32>} : memref<8x32xf32, #tpu.memory_space<vmem>>, vector<8x32xf32>,
    %c0_93 = arith.constant 0 : index
    %c0_94 = arith.constant 0 : index
    %329 = vector.load %arg11[%c0_93, %c0_94] : memref<8x32xf32, #tpu.memory_space<vmem>>, vector<8x32xf32>
    tpu.vector_store %arg11[%c0_93, %c0_94], %323 {strides = array<i32>} : memref<8x32xf32, #tpu.memory_space<vmem>>, vector<8x32xf32>,
    %c0_95 = arith.constant 0 : index
    %c0_96 = arith.constant 0 : index
    %c0_97 = arith.constant 0 : index
    %330 = vector.load %arg6[%c0_95, %c0_96, %c0_97] : memref<1x1x32xf32, #tpu.memory_space<vmem>>, vector<1x1x32xf32>
    %331 = vector.shape_cast %330 : vector<1x1x32xf32> to vector<1x32xf32>
    %c0_98 = arith.constant 0 : index
    %c0_99 = arith.constant 0 : index
    %332 = vector.load %arg9[%c0_98, %c0_99] : memref<64x32xf32, #tpu.memory_space<vmem>>, vector<64x32xf32>
    %333 = tpu.transpose %332, [1, 0] : vector<64x32xf32> -> vector<32x64xf32>
    %cst_100 = arith.constant dense<0.000000e+00> : vector<1x64xf32>
    %334 = tpu.matmul %331, %333, %cst_100 {dimension_numbers = #tpu.dot_dimension_numbers<[1], [0], [0], [1], [0, 0, 1, 1], [], []>} : vector<1x32xf32>, vector<32x64xf32>, vector<1x64xf32> -> vector<1x64xf32>
    %c0_101 = arith.constant 0 : index
    %335 = arith.index_cast %4 : i32 to index
    %c0_102 = arith.constant 0 : index
    %336 = vector.load %arg7[%c0_101, %335, %c0_102] : memref<1x1x64xf32, #tpu.memory_space<vmem>>, vector<1x1x64xf32>
    %337 = vector.shape_cast %336 : vector<1x1x64xf32> to vector<1x64xf32>
    %338 = vector.shape_cast %334 : vector<1x64xf32> to vector<1x1x64xf32>
    tpu.vector_store %arg7[%c0_101, %335, %c0_102], %338 {strides = array<i32>} : memref<1x1x64xf32, #tpu.memory_space<vmem>>, vector<1x1x64xf32>,
    return
  }
  func.func @transform_0(%arg0: i32, %arg1: i32) -> (i32, i32) {
    %c0_i32 = arith.constant 0 : i32
    %c0_i32_0 = arith.constant 0 : i32
    %c0_i32_1 = arith.constant 0 : i32
    return %c0_i32, %c0_i32_0 : i32, i32
  }
  func.func @transform_1(%arg0: i32, %arg1: i32) -> (i32, i32, i32) {
    %c0_i32 = arith.constant 0 : i32
    %c0_i32_0 = arith.constant 0 : i32
    %c0_i32_1 = arith.constant 0 : i32
    return %arg0, %c0_i32, %c0_i32_0 : i32, i32, i32
  }
  func.func @transform_2(%arg0: i32, %arg1: i32) -> (i32, i32, i32) {
    %c0_i32 = arith.constant 0 : i32
    %c0_i32_0 = arith.constant 0 : i32
    %c0_i32_1 = arith.constant 0 : i32
    return %arg0, %c0_i32, %c0_i32_0 : i32, i32, i32
  }
  func.func @transform_3(%arg0: i32, %arg1: i32) -> (i32, i32, i32) {
    %c0_i32 = arith.constant 0 : i32
    %c0_i32_0 = arith.constant 0 : i32
    %c0_i32_1 = arith.constant 0 : i32
    return %arg0, %c0_i32, %c0_i32_0 : i32, i32, i32
  }
  func.func @transform_4(%arg0: i32, %arg1: i32) -> (i32, i32, i32) {
    %c0_i32 = arith.constant 0 : i32
    %c0_i32_0 = arith.constant 0 : i32
    %c0_i32_1 = arith.constant 0 : i32
    return %arg0, %c0_i32, %c0_i32_0 : i32, i32, i32
  }
  func.func @transform_5(%arg0: i32, %arg1: i32) -> (i32, i32, i32) {
    %c0_i32 = arith.constant 0 : i32
    %c0_i32_0 = arith.constant 0 : i32
    %c0_i32_1 = arith.constant 0 : i32
    return %arg0, %c0_i32, %c0_i32_0 : i32, i32, i32
  }
}

</mosaic_0001>

<llo_original>
// kernel: tpu_custom_call.1
$region0: #{tpu_custom_call.1}
  #allocation0 [shape = 'u32[]', space=smem, size = 0x4, offset = 0x4, fixed_abs, tag = 'smem constant byte address 0x4 - core index']
  #allocation1 [shape = 'u32[72,128]{1,0:T(1,128)}', space=vmem, size = 0x9000, scoped, tag = 'internal scratch']
  #allocation2 [shape = 'f32[64,128]{1,0:T(8,128)}', space=vmem, size = 0x8000, scoped, tag = 'scratch operand']
  #allocation3 [shape = 'f32[64,32]{1,0:T(8,128)}', space=vmem, size = 0x8000, scoped, tag = 'scratch operand']
  #allocation4 [shape = 'f32[8,32]{1,0:T(8,128)}', space=vmem, size = 0x1000, scoped, tag = 'scratch operand']
  #allocation5 [shape = 'f32[8,32]{1,0:T(8,128)}', space=vmem, size = 0x1000, scoped, tag = 'scratch operand']
  %s0 = inlined_call_operand.vmem [shape: f32[64,16], index: 0, kind: input, shape index: {}]
  %s1 = inlined_call_operand.hbm [shape: f32[2,16,128], index: 1, kind: input, shape index: {}]
  %s2 = inlined_call_operand.vmem [shape: f32[2,32,128], index: 2, kind: input, shape index: {}]
  %s3 = inlined_call_operand.vmem [shape: f32[2,1,128], index: 3, kind: input, shape index: {}]
  %s4 = inlined_call_operand.vmem [shape: f32[2,1,32], index: 4, kind: input, shape index: {}]
  %s5 = inlined_call_operand.hbm [shape: f32[2,1,64], index: 5, kind: output, shape index: {}]
  %s6 = sld [smem:[#allocation0]]
  $region61: #{tpu_custom_call.1} parent=0
    _
  %s8 = ssub.s32 1, %s6
  %s9 = scalar_select 0, %s8, %s6
  $region1: #{tpu_custom_call.1} parent=0
    #allocation6 [shape = 'u8[16384]{0}', space=vmem, size = 0x4000, scoped, tag = 'input window, operand 1']
    #allocation7 [shape = 's32[2]{0}', space=sflag, size = 0x8, scoped, tag = 'scoped memory for tpu_custom_call.1']
    #allocation8 [shape = 's32[2]{0}', space=sflag, size = 0x8, scoped, tag = 'scoped memory for tpu_custom_call.1']
    #allocation9 [shape = 'u8[1024]{0}', space=vmem, size = 0x400, scoped, tag = 'output window, operand 0']
    %10 = vsyncpa [#allocation7], 0
    %s11 = scalar_lea.sflag [#allocation7], 1
    %12 = vsyncpa %s11, 0
    %13 = vsyncpa [#allocation8], 0
    %s14 = scalar_lea.sflag [#allocation8], 1
    %15 = vsyncpa %s14, 0
    loop: start=0, step=1, limit=4
    $region2: #{tpu_custom_call.1} parent=1 // loop_pre_header
      _
    $region3: #{tpu_custom_call.1} parent=1 // loop_header
      %s17 = sphi 0, %s21
      %p18 = scmp.ge.s32.totalorder %s17, 4
      %s24 = sphi 0, %s36
      %s25 = sphi 0, %s32
      %s26 = sphi 0, %s24
      %s27 = sphi 0, %s25
      %s28 = sphi 0, %s26
      %s29 = sphi 0, %s27
      %s37 = sphi 0, %s37
      %s39 = sphi 0, %s37
      %s40 = sphi 0, %s39
      %s54 = sphi 0, %s40
      %s60 = sphi 0, %s62
      %s63 = sphi 0, %s60
      %s64 = sphi 0, %s63
      %s80 = sphi 0, %s64
      %s86 = sphi 0, %s88
      %s89 = sphi 0, %s86
      %s90 = sphi 0, %s89
      %s106 = sphi 0, %s90
      %s112 = sphi 0, %s114
      %s115 = sphi 0, %s112
      %s116 = sphi 0, %s115
      %s132 = sphi 0, %s116
      %s138 = sphi 0, %s140
      %s141 = sphi 0, %s138
      %s142 = sphi 0, %s141
      %s158 = sphi 0, %s142
      %s164 = sphi 0, %s166
      %s167 = sphi 0, %s164
      %s168 = sphi 0, %s167
      %s184 = sphi 0, %s168
    $region4: #{tpu_custom_call.1} parent=1 // loop_header_branch
      %20 = sbr.rel (%p18) target = $region8
    $region5: #{tpu_custom_call.1} parent=1 // loop_body
      %s22 = ssub.s32 %s17, 1
      %s23 = ssub.s32 %s17, 2
      %s30 = sadd.s32 1, %s25
      %p31 = scmp.ge.s32.totalorder %s30, 1
      %s32 = scalar_select %p31, 0, %s30
      %s33 = sadd.s32 1, %s24
      %s34 = scalar_select %p31, %s33, %s24
      %p35 = scmp.ge.s32.totalorder %s34, 2
      %s36 = scalar_select %p35, 0, %s34
      %s38 = sadd.s32 %s37, 1
      %p41 = scmp.eq.s32.totalorder %s17, 1
      %p42 = scmp.ne.s32.totalorder %s37, %s39
      %p43 = scmp.eq.s32.totalorder %s17, 0
      %p44 = por %p42, %p43
      %p45 = scmp.ne.s32.totalorder %s37, %s39
      %p46 = scmp.eq.s32.totalorder %s22, 1
      %p47 = por %p45, %p46
      %p48 = scmp.ne.s32.totalorder %s39, %s40
      %p49 = scmp.eq.s32.totalorder %s22, 0
      %p50 = por %p48, %p49
      %p51 = scmp.ne.s32.totalorder %s39, %s40
      %p52 = scmp.eq.s32.totalorder %s23, 1
      %p53 = por %p51, %p52
      %p55 = scmp.ne.s32.totalorder %s40, %s54
      %p56 = scmp.eq.s32.totalorder %s23, 0
      %p57 = por %p55, %p56
      %s58 = ssub.s32 %s24, %s36
      %p59 = scmp.eq.s32.totalorder %s58, 0
      %s61 = sadd.s32 %s60, 1
      %s62 = scalar_select %p59, %s60, %s61
      %p65 = pneg %p59
      %p66 = scmp.eq.s32.totalorder %s17, 1
      %p67 = por %p65, %p66
      %p68 = scmp.ne.s32.totalorder %s60, %s63
      %p69 = scmp.eq.s32.totalorder %s17, 0
      %p70 = por %p68, %p69
      %p71 = scmp.ne.s32.totalorder %s60, %s63
      %p72 = scmp.eq.s32.totalorder %s22, 1
      %p73 = por %p71, %p72
      %p74 = scmp.ne.s32.totalorder %s63, %s64
      %p75 = scmp.eq.s32.totalorder %s22, 0
      %p76 = por %p74, %p75
      %p77 = scmp.ne.s32.totalorder %s63, %s64
      %p78 = scmp.eq.s32.totalorder %s23, 1
      %p79 = por %p77, %p78
      %p81 = scmp.ne.s32.totalorder %s64, %s80
      %p82 = scmp.eq.s32.totalorder %s23, 0
      %p83 = por %p81, %p82
      %s84 = ssub.s32 %s24, %s36
      %p85 = scmp.eq.s32.totalorder %s84, 0
      %s87 = sadd.s32 %s86, 1
      %s88 = scalar_select %p85, %s86, %s87
      %p91 = pneg %p85
      %p92 = scmp.eq.s32.totalorder %s17, 1
      %p93 = por %p91, %p92
      %p94 = scmp.ne.s32.totalorder %s86, %s89
      %p95 = scmp.eq.s32.totalorder %s17, 0
      %p96 = por %p94, %p95
      %p97 = scmp.ne.s32.totalorder %s86, %s89
      %p98 = scmp.eq.s32.totalorder %s22, 1
      %p99 = por %p97, %p98
      %p100 = scmp.ne.s32.totalorder %s89, %s90
      %p101 = scmp.eq.s32.totalorder %s22, 0
      %p102 = por %p100, %p101
      %p103 = scmp.ne.s32.totalorder %s89, %s90
      %p104 = scmp.eq.s32.totalorder %s23, 1
      %p105 = por %p103, %p104
      %p107 = scmp.ne.s32.totalorder %s90, %s106
      %p108 = scmp.eq.s32.totalorder %s23, 0
      %p109 = por %p107, %p108
      %s110 = ssub.s32 %s24, %s36
      %p111 = scmp.eq.s32.totalorder %s110, 0
      %s113 = sadd.s32 %s112, 1
      %s114 = scalar_select %p111, %s112, %s113
      %p117 = pneg %p111
      %p118 = scmp.eq.s32.totalorder %s17, 1
      %p119 = por %p117, %p118
      %p120 = scmp.ne.s32.totalorder %s112, %s115
      %p121 = scmp.eq.s32.totalorder %s17, 0
      %p122 = por %p120, %p121
      %p123 = scmp.ne.s32.totalorder %s112, %s115
      %p124 = scmp.eq.s32.totalorder %s22, 1
      %p125 = por %p123, %p124
      %p126 = scmp.ne.s32.totalorder %s115, %s116
      %p127 = scmp.eq.s32.totalorder %s22, 0
      %p128 = por %p126, %p127
      %p129 = scmp.ne.s32.totalorder %s115, %s116
      %p130 = scmp.eq.s32.totalorder %s23, 1
      %p131 = por %p129, %p130
      %p133 = scmp.ne.s32.totalorder %s116, %s132
      %p134 = scmp.eq.s32.totalorder %s23, 0
      %p135 = por %p133, %p134
      %s136 = ssub.s32 %s24, %s36
      %p137 = scmp.eq.s32.totalorder %s136, 0
      %s139 = sadd.s32 %s138, 1
      %s140 = scalar_select %p137, %s138, %s139
      %p143 = pneg %p137
      %p144 = scmp.eq.s32.totalorder %s17, 1
      %p145 = por %p143, %p144
      %p146 = scmp.ne.s32.totalorder %s138, %s141
      %p147 = scmp.eq.s32.totalorder %s17, 0
      %p148 = por %p146, %p147
      %p149 = scmp.ne.s32.totalorder %s138, %s141
      %p150 = scmp.eq.s32.totalorder %s22, 1
      %p151 = por %p149, %p150
      %p152 = scmp.ne.s32.totalorder %s141, %s142
      %p153 = scmp.eq.s32.totalorder %s22, 0
      %p154 = por %p152, %p153
      %p155 = scmp.ne.s32.totalorder %s141, %s142
      %p156 = scmp.eq.s32.totalorder %s23, 1
      %p157 = por %p155, %p156
      %p159 = scmp.ne.s32.totalorder %s142, %s158
      %p160 = scmp.eq.s32.totalorder %s23, 0
      %p161 = por %p159, %p160
      %s162 = ssub.s32 %s24, %s36
      %p163 = scmp.eq.s32.totalorder %s162, 0
      %s165 = sadd.s32 %s164, 1
      %s166 = scalar_select %p163, %s164, %s165
      %p169 = pneg %p163
      %p170 = scmp.eq.s32.totalorder %s17, 1
      %p171 = por %p169, %p170
      %p172 = scmp.ne.s32.totalorder %s164, %s167
      %p173 = scmp.eq.s32.totalorder %s17, 0
      %p174 = por %p172, %p173
      %p175 = scmp.ne.s32.totalorder %s164, %s167
      %p176 = scmp.eq.s32.totalorder %s22, 1
      %p177 = por %p175, %p176
      %p178 = scmp.ne.s32.totalorder %s167, %s168
      %p179 = scmp.eq.s32.totalorder %s22, 0
      %p180 = por %p178, %p179
      %p181 = scmp.ne.s32.totalorder %s167, %s168
      %p182 = scmp.eq.s32.totalorder %s23, 1
      %p183 = por %p181, %p182
      %p185 = scmp.ne.s32.totalorder %s168, %s184
      %p186 = scmp.eq.s32.totalorder %s23, 0
      %p187 = por %p185, %p186
      %p188 = scmp.le.s32.totalorder 1, %s17
      %p189 = scmp.lt.s32.totalorder %s17, 3
      %p190 = pnand %p188, %p189
      %p191 = pneg %p190
      // Predicated region
      $region9: #{tpu_custom_call.1} parent=5 // pred_check
        _
      $region10: #{tpu_custom_call.1} parent=5 // pred_check_branch
        %193 = sbr.rel (%p190) target = $region12
      $region11: #{tpu_custom_call.1} parent=5 // pred_region
        %s194 = ssub.s32 %s17, 1
        // Predicated region
        $region13: #{tpu_custom_call.1} parent=11 // pred_check
          %p195 = pneg %p50
        $region14: #{tpu_custom_call.1} parent=11 // pred_check_branch
          %197 = sbr.rel (%p195) target = $region16
        $region15: #{tpu_custom_call.1} parent=11 // pred_region
          _
        $region16: #{tpu_custom_call.1} parent=11 // pred_fallthru
          _
      $region12: #{tpu_custom_call.1} parent=5 // pred_fallthru
        _
      %p198 = scmp.lt.s32.totalorder %s17, 2
      // Predicated region
      $region17: #{tpu_custom_call.1} parent=5 // pred_check
        %p199 = pneg %p198
      $region18: #{tpu_custom_call.1} parent=5 // pred_check_branch
        %201 = sbr.rel (%p199) target = $region20
      $region19: #{tpu_custom_call.1} parent=5 // pred_region
        // Predicated region
        $region21: #{tpu_custom_call.1} parent=19 // pred_check
          %p202 = pneg %p70
        $region22: #{tpu_custom_call.1} parent=19 // pred_check_branch
          %204 = sbr.rel (%p202) target = $region24
        $region23: #{tpu_custom_call.1} parent=19 // pred_region
          %s205 = sand.u32 %s60, 1
          %s206 = scalar_lea.sflag [#allocation7], %s205
          %s207 = sand.u32 %s60, 1
          %s208 = smul.addr %s207, 16
          %s209 = scalar_lea.vmem [#allocation6], %s208
          %211 = vsyncadd %s206, 0
          %s212 = smul.addr %s24, 2
          %s213 = smul.addr %s212, 8
          %s214 = scalar_lea.hbm %s1, %s213
          %s215 = sshll.u32 %s214, 4
          %s216 = int_to_ptr.hbm [resolvable:$true] %s215
          %s217 = sshll.u32 %s209, 4
          %s218 = int_to_ptr.vmem [resolvable:$true] %s217
          %223 = dma.hbm_to_vmem [thread:$0]  %s216, 256, %s218, %s206, 128, 128, 8
        $region24: #{tpu_custom_call.1} parent=19 // pred_fallthru
          _
        // Predicated region
        $region25: #{tpu_custom_call.1} parent=19 // pred_check
          %p224 = pneg %p96
        $region26: #{tpu_custom_call.1} parent=19 // pred_check_branch
          %226 = sbr.rel (%p224) target = $region28
        $region27: #{tpu_custom_call.1} parent=19 // pred_region
          %p227 = scmp.lt.s32.totalorder %s24, 1
          %s228 = scalar_select %p227, %s24, 1
          %s229 = smul.addr %s228, 4
          %s230 = smul.addr %s229, 8
          %s231 = scalar_lea.vmem %s2, %s230
        $region28: #{tpu_custom_call.1} parent=19 // pred_fallthru
          _
        // Predicated region
        $region29: #{tpu_custom_call.1} parent=19 // pred_check
          %p232 = pneg %p122
        $region30: #{tpu_custom_call.1} parent=19 // pred_check_branch
          %234 = sbr.rel (%p232) target = $region32
        $region31: #{tpu_custom_call.1} parent=19 // pred_region
          %p235 = scmp.lt.s32.totalorder %s24, 1
          %s236 = scalar_select %p235, %s24, 1
          %s237 = scalar_lea.vmem %s3, %s236
        $region32: #{tpu_custom_call.1} parent=19 // pred_fallthru
          _
        // Predicated region
        $region33: #{tpu_custom_call.1} parent=19 // pred_check
          %p238 = pneg %p148
        $region34: #{tpu_custom_call.1} parent=19 // pred_check_branch
          %240 = sbr.rel (%p238) target = $region36
        $region35: #{tpu_custom_call.1} parent=19 // pred_region
          %p241 = scmp.lt.s32.totalorder %s24, 1
          %s242 = scalar_select %p241, %s24, 1
          %s243 = scalar_lea.vmem %s4, %s242
        $region36: #{tpu_custom_call.1} parent=19 // pred_fallthru
          _
      $region20: #{tpu_custom_call.1} parent=5 // pred_fallthru
        _
      %p244 = scmp.le.s32.totalorder 1, %s17
      %p245 = scmp.lt.s32.totalorder %s17, 3
      %p246 = pnand %p244, %p245
      %p247 = pneg %p246
      // Predicated region
      $region37: #{tpu_custom_call.1} parent=5 // pred_check
        _
      $region38: #{tpu_custom_call.1} parent=5 // pred_check_branch
        %249 = sbr.rel (%p246) target = $region40
      $region39: #{tpu_custom_call.1} parent=5 // pred_region
        %s250 = ssub.s32 %s17, 1
        %s251 = sand.u32 %s63, 1
        %s252 = scalar_lea.sflag [#allocation7], %s251
        %s253 = sand.u32 %s63, 1
        %s254 = smul.addr %s253, 16
        %s255 = scalar_lea.vmem [#allocation6], %s254
        // Predicated region
        $region41: #{tpu_custom_call.1} parent=39 // pred_check
          %p256 = pneg %p76
        $region42: #{tpu_custom_call.1} parent=39 // pred_check_branch
          %258 = sbr.rel (%p256) target = $region44
        $region43: #{tpu_custom_call.1} parent=39 // pred_region
          %260 = dma.done %s252, 256
        $region44: #{tpu_custom_call.1} parent=39 // pred_fallthru
          _
        %p261 = pneg %p50
        %p262 = pneg %p47
        %s263 = sand.u32 %s63, 1
        %s264 = scalar_lea.sflag [#allocation7], %s263
        %s265 = sand.u32 %s63, 1
        %s266 = smul.addr %s265, 16
        %s267 = scalar_lea.vmem [#allocation6], %s266
        %p268 = pneg %p76
        %p269 = pneg %p73
        %p270 = scmp.lt.s32.totalorder %s26, 1
        %s271 = scalar_select %p270, %s26, 1
        %s272 = smul.addr %s271, 4
        %s273 = smul.addr %s272, 8
        %s274 = scalar_lea.vmem %s2, %s273
        %p275 = pneg %p102
        %p276 = pneg %p99
        %p277 = scmp.lt.s32.totalorder %s26, 1
        %s278 = scalar_select %p277, %s26, 1
        %s279 = scalar_lea.vmem %s3, %s278
        %p280 = pneg %p128
        %p281 = pneg %p125
        %p282 = scmp.lt.s32.totalorder %s26, 1
        %s283 = scalar_select %p282, %s26, 1
        %s284 = scalar_lea.vmem %s4, %s283
        %p285 = pneg %p154
        %p286 = pneg %p151
        %p287 = pneg %p180
        %p288 = pneg %p177
        %s289 = sand.u32 %s167, 1
        %s290 = scalar_lea.sflag [#allocation8], %s289
        %s291 = sand.u32 %s167, 1
        %s292 = scalar_lea.vmem [#allocation9], %s291
        %p293 = scmp.lt.s32.totalorder %s26, 1
        %s294 = scalar_select %p293, %s26, 1
        %s295 = smul.addr %s294, 4
        %s296 = smul.addr %s295, 8
        %s297 = scalar_lea.vmem %s2, %s296
        %p298 = scmp.lt.s32.totalorder %s26, 1
        %s299 = scalar_select %p298, %s26, 1
        %s300 = scalar_lea.vmem %s3, %s299
        %p301 = scmp.lt.s32.totalorder %s26, 1
        %s302 = scalar_select %p301, %s26, 1
        %s303 = scalar_lea.vmem %s4, %s302
        %s304 = ssub.s32 1, %s26
        %s305 = smul.u32 %s304, %s27
        %s306 = ssub.s32 0, %s27
        %s307 = smul.u32 %s26, %s306
        %s308 = sadd.s32 %s305, %s307
        %p309 = scmp.eq.s32.totalorder %s27, 0
        // Predicated region
        $region45: #{tpu_custom_call.1} parent=39 // pred_check
          %p310 = pneg %p309
        $region46: #{tpu_custom_call.1} parent=39 // pred_check_branch
          %312 = sbr.rel (%p310) target = $region48
        $region47: #{tpu_custom_call.1} parent=39 // pred_region
          %vm313 = vcmask 261120
          %314 = vst.msk [vmem:[#allocation4] sm:$0xff] %vm313, 0.0
          %315 = vst.msk [vmem:[#allocation5] sm:$0xff] %vm313, 0.0
        $region48: #{tpu_custom_call.1} parent=39 // pred_fallthru
          _
        %s316 = smul.u32 %s308, 64
        %s317 = scalar_lea.vmem %s0, %s316
        %v318 = vld [vmem:[%s317] sm:$0xff]
        %v319 = vld [vmem:[%s317 + $0x8] sm:$0xff]
        %v320 = vld [vmem:[%s317 + $0x10] sm:$0xff]
        %v321 = vld [vmem:[%s317 + $0x18] sm:$0xff]
        %v322 = vld [vmem:[%s317 + $0x20] sm:$0xff]
        %v323 = vld [vmem:[%s317 + $0x28] sm:$0xff]
        %v324 = vld [vmem:[%s317 + $0x30] sm:$0xff]
        %v325 = vld [vmem:[%s317 + $0x38] sm:$0xff]
        %v326 = vld [vmem:[%s255] sm:$0xff]
        %v327 = vld [vmem:[%s255 + $0x8] sm:$0xff]
        %v328 = vld [vmem:[%s300] sm:$0x1]
        %v330 = vperm.slane %v328, 0
        %vm332 = vcmask 130048
        %v334 = vsel %vm332, %v318, 0
        %v337 = vsel %vm332, %v319, 0
        %v340 = vsel %vm332, %v320, 0
        %v343 = vsel %vm332, %v321, 0
        %v346 = vsel %vm332, %v322, 0
        %v349 = vsel %vm332, %v323, 0
        %v352 = vsel %vm332, %v324, 0
        %v355 = vsel %vm332, %v325, 0
        %357 = vmatpush.msra.mxu0 0.0
        %358 = vmatpush.msra.mxu0 0.0
        %359 = vmatpush.msra.mxu0 0.0
        %360 = vmatpush.msra.mxu0 0.0
        %361 = vmatpush.msra.mxu0 0.0
        %362 = vmatpush.msra.mxu0 0.0
        %363 = vmatpush.msra.mxu0 0.0
        %364 = vmatpush.msra.mxu0 0.0
        %365 = vmatpush.msra.mxu0 0.0
        %366 = vmatpush.msra.mxu0 0.0
        %367 = vmatpush.msra.mxu0 0.0
        %368 = vmatpush.msra.mxu0 0.0
        %369 = vmatpush.msra.mxu0 0.0
        %370 = vmatpush.msra.mxu0 0.0
        %371 = vmatpush.msra.mxu0 %v327
        %372 = vmatpush.msra.mxu0 %v326
        %373 = vmatmul.f32.gmra.mxu0 %v334
        %v374 = vpop.f32.mrf.mxu0
        %v375 = vadd.f32 %v330, %v374
        %376 = vmatmul.f32.gmra.mxu0 %v337
        %v377 = vpop.f32.mrf.mxu0
        %v378 = vadd.f32 %v330, %v377
        %379 = vmatmul.f32.gmra.mxu0 %v340
        %v380 = vpop.f32.mrf.mxu0
        %v381 = vadd.f32 %v330, %v380
        %382 = vmatmul.f32.gmra.mxu0 %v343
        %v383 = vpop.f32.mrf.mxu0
        %v384 = vadd.f32 %v330, %v383
        %385 = vmatmul.f32.gmra.mxu0 %v346
        %v386 = vpop.f32.mrf.mxu0
        %v387 = vadd.f32 %v330, %v386
        %388 = vmatmul.f32.gmra.mxu0 %v349
        %v389 = vpop.f32.mrf.mxu0
        %v390 = vadd.f32 %v330, %v389
        %391 = vmatmul.f32.gmra.mxu0 %v352
        %v392 = vpop.f32.mrf.mxu0
        %v393 = vadd.f32 %v330, %v392
        %394 = vmatmul.f32.gmra.mxu0 %v355
        %v395 = vpop.f32.mrf.mxu0
        %v396 = vadd.f32 %v330, %v395
        %397 = vdwg.mxu0
        %398 = vst [vmem:[#allocation2] sm:$0xff] %v375
        %399 = vst [vmem:[#allocation2 + $0x8] sm:$0xff] %v378
        %400 = vst [vmem:[#allocation2 + $0x10] sm:$0xff] %v381
        %401 = vst [vmem:[#allocation2 + $0x18] sm:$0xff] %v384
        %402 = vst [vmem:[#allocation2 + $0x20] sm:$0xff] %v387
        %403 = vst [vmem:[#allocation2 + $0x28] sm:$0xff] %v390
        %404 = vst [vmem:[#allocation2 + $0x30] sm:$0xff] %v393
        %405 = vst [vmem:[#allocation2 + $0x38] sm:$0xff] %v396
        %v406 = vld [vmem:[%s297] sm:$0xff]
        %v407 = vld [vmem:[%s297 + $0x8] sm:$0xff]
        %v408 = vld [vmem:[%s297 + $0x10] sm:$0xff]
        %v409 = vld [vmem:[%s297 + $0x18] sm:$0xff]
        %v410 = vld [vmem:[#allocation4] sm:$0xff]
        %v411 = vld [vmem:[#allocation5] sm:$0xff]
        %s412 = smul.u32 %s26, 56
        %s413 = scalar_lea.vmem [#allocation2], %s412
        %v414 = vld [vmem:[%s413] sm:$0xff]
        %vm415 = vcmask 261120
        %v417 = vsel %vm415, %v410, 0
        %419 = vmatpush.msra.mxu0 0.0
        %420 = vmatpush.msra.mxu0 0.0
        %421 = vmatpush.msra.mxu0 0.0
        %422 = vmatpush.msra.mxu0 0.0
        %423 = vmatpush.msra.mxu0 0.0
        %424 = vmatpush.msra.mxu0 0.0
        %425 = vmatpush.msra.mxu0 0.0
        %426 = vmatpush.msra.mxu0 0.0
        %427 = vmatpush.msra.mxu0 0.0
        %428 = vmatpush.msra.mxu0 0.0
        %429 = vmatpush.msra.mxu0 0.0
        %430 = vmatpush.msra.mxu0 0.0
        %431 = vmatpush.msra.mxu0 %v409
        %432 = vmatpush.msra.mxu0 %v408
        %433 = vmatpush.msra.mxu0 %v407
        %434 = vmatpush.msra.mxu0 %v406
        %435 = vmatmul.f32.gmra.mxu0 %v417
        %v436 = vpop.f32.mrf.mxu0
        %v437 = vadd.f32 0.0, %v436
        %438 = vdwg.mxu0
        %v439 = vadd.f32 %v414, %v437
        %v440 = vxor.u32 %v439, 2147483648
        %v441 = vmul.f32 %v440, 1.442695
        %v442 = vpow.pop %v441
        %v443 = vadd.f32 %v442, 1.0
        %v444 = vrcp.pop %v443
        %v445 = vmul.f32 %v443, %v444
        %v446 = vsub.f32 1.0, %v445
        %v447 = vmul.f32 %v444, %v446
        %v448 = vadd.f32 %v444, %v447
        %vm449 = vweird.f32 %v443
        %vm450 = vweird.f32 %v444
        %vm451 = vmor %vm449, %vm450
        %v452 = vsel %vm451, %v444, %v448
        %v453 = vand.u32 2147483647, %v443
        %vm454 = vcmp.eq.f32.partialorder %v453, 8.507059e+37
        %v455 = vand.u32 %v443, 2147483648
        %v456 = vor.u32 1.1754944e-38, %v455
        %v457 = vsel %vm454, %v456, %v452
        %v458 = vmul.f32 1.0, %v457
        %v459 = vtanh.pop %v439
        %461 = vrot.lane.b32.xlu0 %v411, 32
        %v462 = vpop.permute.xlu0 %461
        %v464 = vmul.f32 %v458, %v462
        %466 = vrot.lane.b32.xlu0 %v459, 64
        %v467 = vpop.permute.xlu0 %466
        %v469 = vmul.f32 %v458, %v467
        %471 = vrot.lane.b32.xlu0 %v469, 32
        %v472 = vpop.permute.xlu0 %471
        %v474 = vadd.f32 %v464, %v472
        %v475 = vtanh.pop %v474
        %477 = vrot.lane.b32.xlu0 %v475, 64
        %v478 = vpop.permute.xlu0 %477
        %v480 = vmul.f32 %v458, %v478
        %482 = vrot.lane.b32.xlu0 %v480, 32
        %v483 = vpop.permute.xlu0 %482
        %s485 = scalar_lea.vmem [#allocation3], %s412
        %486 = vst.msk [vmem:[%s485] sm:$0xff] %vm415, %v483
        %s487 = smul.u32 %s26, 6
        %s488 = sadd.s32 %s304, %s487
        %s489 = smul.u32 %s488, 8
        %s490 = scalar_lea.vmem [#allocation2], %s489
        %v491 = vld [vmem:[%s490] sm:$0xff]
        %v492 = vsel %vm415, %v483, 0
        %494 = vmatpush.msra.mxu0 0.0
        %495 = vmatpush.msra.mxu0 0.0
        %496 = vmatpush.msra.mxu0 0.0
        %497 = vmatpush.msra.mxu0 0.0
        %498 = vmatpush.msra.mxu0 0.0
        %499 = vmatpush.msra.mxu0 0.0
        %500 = vmatpush.msra.mxu0 0.0
        %501 = vmatpush.msra.mxu0 0.0
        %502 = vmatpush.msra.mxu0 0.0
        %503 = vmatpush.msra.mxu0 0.0
        %504 = vmatpush.msra.mxu0 0.0
        %505 = vmatpush.msra.mxu0 0.0
        %506 = vmatpush.msra.mxu0 %v409
        %507 = vmatpush.msra.mxu0 %v408
        %508 = vmatpush.msra.mxu0 %v407
        %509 = vmatpush.msra.mxu0 %v406
        %510 = vmatmul.f32.gmra.mxu0 %v492
        %v511 = vpop.f32.mrf.mxu0
        %v512 = vadd.f32 0.0, %v511
        %513 = vdwg.mxu0
        %v514 = vadd.f32 %v491, %v512
        %v515 = vxor.u32 %v514, 2147483648
        %v516 = vmul.f32 %v515, 1.442695
        %v517 = vpow.pop %v516
        %v518 = vadd.f32 %v517, 1.0
        %v519 = vrcp.pop %v518
        %v520 = vmul.f32 %v518, %v519
        %v521 = vsub.f32 1.0, %v520
        %v522 = vmul.f32 %v519, %v521
        %v523 = vadd.f32 %v519, %v522
        %vm524 = vweird.f32 %v518
        %vm525 = vweird.f32 %v519
        %vm526 = vmor %vm524, %vm525
        %v527 = vsel %vm526, %v519, %v523
        %v528 = vand.u32 2147483647, %v518
        %vm529 = vcmp.eq.f32.partialorder %v528, 8.507059e+37
        %v530 = vand.u32 %v518, 2147483648
        %v531 = vor.u32 1.1754944e-38, %v530
        %v532 = vsel %vm529, %v531, %v527
        %v533 = vmul.f32 1.0, %v532
        %v534 = vtanh.pop %v514
        %v535 = vmul.f32 %v533, %v474
        %537 = vrot.lane.b32.xlu0 %v534, 64
        %v538 = vpop.permute.xlu0 %537
        %v540 = vmul.f32 %v533, %v538
        %542 = vrot.lane.b32.xlu0 %v540, 32
        %v543 = vpop.permute.xlu0 %542
        %v545 = vadd.f32 %v535, %v543
        %v546 = vtanh.pop %v545
        %548 = vrot.lane.b32.xlu0 %v546, 64
        %v549 = vpop.permute.xlu0 %548
        %v551 = vmul.f32 %v533, %v549
        %553 = vrot.lane.b32.xlu0 %v551, 32
        %v554 = vpop.permute.xlu0 %553
        %s556 = scalar_lea.vmem [#allocation3], %s489
        %557 = vst.msk [vmem:[%s556] sm:$0xff] %vm415, %v554
        %s558 = smul.u32 %s304, 2
        %s559 = smul.u32 %s26, 5
        %s560 = sadd.s32 %s558, %s559
        %s561 = smul.u32 %s560, 8
        %s562 = scalar_lea.vmem [#allocation2], %s561
        %v563 = vld [vmem:[%s562] sm:$0xff]
        %v564 = vsel %vm415, %v554, 0
        %566 = vmatpush.msra.mxu0 0.0
        %567 = vmatpush.msra.mxu0 0.0
        %568 = vmatpush.msra.mxu0 0.0
        %569 = vmatpush.msra.mxu0 0.0
        %570 = vmatpush.msra.mxu0 0.0
        %571 = vmatpush.msra.mxu0 0.0
        %572 = vmatpush.msra.mxu0 0.0
        %573 = vmatpush.msra.mxu0 0.0
        %574 = vmatpush.msra.mxu0 0.0
        %575 = vmatpush.msra.mxu0 0.0
        %576 = vmatpush.msra.mxu0 0.0
        %577 = vmatpush.msra.mxu0 0.0
        %578 = vmatpush.msra.mxu0 %v409
        %579 = vmatpush.msra.mxu0 %v408
        %580 = vmatpush.msra.mxu0 %v407
        %581 = vmatpush.msra.mxu0 %v406
        %582 = vmatmul.f32.gmra.mxu0 %v564
        %v583 = vpop.f32.mrf.mxu0
        %v584 = vadd.f32 0.0, %v583
        %585 = vdwg.mxu0
        %v586 = vadd.f32 %v563, %v584
        %v587 = vxor.u32 %v586, 2147483648
        %v588 = vmul.f32 %v587, 1.442695
        %v589 = vpow.pop %v588
        %v590 = vadd.f32 %v589, 1.0
        %v591 = vrcp.pop %v590
        %v592 = vmul.f32 %v590, %v591
        %v593 = vsub.f32 1.0, %v592
        %v594 = vmul.f32 %v591, %v593
        %v595 = vadd.f32 %v591, %v594
        %vm596 = vweird.f32 %v590
        %vm597 = vweird.f32 %v591
        %vm598 = vmor %vm596, %vm597
        %v599 = vsel %vm598, %v591, %v595
        %v600 = vand.u32 2147483647, %v590
        %vm601 = vcmp.eq.f32.partialorder %v600, 8.507059e+37
        %v602 = vand.u32 %v590, 2147483648
        %v603 = vor.u32 1.1754944e-38, %v602
        %v604 = vsel %vm601, %v603, %v599
        %v605 = vmul.f32 1.0, %v604
        %v606 = vtanh.pop %v586
        %v607 = vmul.f32 %v605, %v545
        %609 = vrot.lane.b32.xlu0 %v606, 64
        %v610 = vpop.permute.xlu0 %609
        %v612 = vmul.f32 %v605, %v610
        %614 = vrot.lane.b32.xlu0 %v612, 32
        %v615 = vpop.permute.xlu0 %614
        %v617 = vadd.f32 %v607, %v615
        %v618 = vtanh.pop %v617
        %620 = vrot.lane.b32.xlu0 %v618, 64
        %v621 = vpop.permute.xlu0 %620
        %v623 = vmul.f32 %v605, %v621
        %625 = vrot.lane.b32.xlu0 %v623, 32
        %v626 = vpop.permute.xlu0 %625
        %s628 = scalar_lea.vmem [#allocation3], %s561
        %629 = vst.msk [vmem:[%s628] sm:$0xff] %vm415, %v626
        %s630 = smul.u32 %s304, 3
        %s631 = smul.u32 %s26, 4
        %s632 = sadd.s32 %s630, %s631
        %s633 = smul.u32 %s632, 8
        %s634 = scalar_lea.vmem [#allocation2], %s633
        %v635 = vld [vmem:[%s634] sm:$0xff]
        %v636 = vsel %vm415, %v626, 0
        %638 = vmatpush.msra.mxu0 0.0
        %639 = vmatpush.msra.mxu0 0.0
        %640 = vmatpush.msra.mxu0 0.0
        %641 = vmatpush.msra.mxu0 0.0
        %642 = vmatpush.msra.mxu0 0.0
        %643 = vmatpush.msra.mxu0 0.0
        %644 = vmatpush.msra.mxu0 0.0
        %645 = vmatpush.msra.mxu0 0.0
        %646 = vmatpush.msra.mxu0 0.0
        %647 = vmatpush.msra.mxu0 0.0
        %648 = vmatpush.msra.mxu0 0.0
        %649 = vmatpush.msra.mxu0 0.0
        %650 = vmatpush.msra.mxu0 %v409
        %651 = vmatpush.msra.mxu0 %v408
        %652 = vmatpush.msra.mxu0 %v407
        %653 = vmatpush.msra.mxu0 %v406
        %654 = vmatmul.f32.gmra.mxu0 %v636
        %v655 = vpop.f32.mrf.mxu0
        %v656 = vadd.f32 0.0, %v655
        %657 = vdwg.mxu0
        %v658 = vadd.f32 %v635, %v656
        %v659 = vxor.u32 %v658, 2147483648
        %v660 = vmul.f32 %v659, 1.442695
        %v661 = vpow.pop %v660
        %v662 = vadd.f32 %v661, 1.0
        %v663 = vrcp.pop %v662
        %v664 = vmul.f32 %v662, %v663
        %v665 = vsub.f32 1.0, %v664
        %v666 = vmul.f32 %v663, %v665
        %v667 = vadd.f32 %v663, %v666
        %vm668 = vweird.f32 %v662
        %vm669 = vweird.f32 %v663
        %vm670 = vmor %vm668, %vm669
        %v671 = vsel %vm670, %v663, %v667
        %v672 = vand.u32 2147483647, %v662
        %vm673 = vcmp.eq.f32.partialorder %v672, 8.507059e+37
        %v674 = vand.u32 %v662, 2147483648
        %v675 = vor.u32 1.1754944e-38, %v674
        %v676 = vsel %vm673, %v675, %v671
        %v677 = vmul.f32 1.0, %v676
        %v678 = vtanh.pop %v658
        %v679 = vmul.f32 %v677, %v617
        %681 = vrot.lane.b32.xlu0 %v678, 64
        %v682 = vpop.permute.xlu0 %681
        %v684 = vmul.f32 %v677, %v682
        %686 = vrot.lane.b32.xlu0 %v684, 32
        %v687 = vpop.permute.xlu0 %686
        %v689 = vadd.f32 %v679, %v687
        %v690 = vtanh.pop %v689
        %692 = vrot.lane.b32.xlu0 %v690, 64
        %v693 = vpop.permute.xlu0 %692
        %v695 = vmul.f32 %v677, %v693
        %697 = vrot.lane.b32.xlu0 %v695, 32
        %v698 = vpop.permute.xlu0 %697
        %s700 = scalar_lea.vmem [#allocation3], %s633
        %701 = vst.msk [vmem:[%s700] sm:$0xff] %vm415, %v698
        %s702 = smul.u32 %s304, 4
        %s703 = smul.u32 %s26, 3
        %s704 = sadd.s32 %s702, %s703
        %s705 = smul.u32 %s704, 8
        %s706 = scalar_lea.vmem [#allocation2], %s705
        %v707 = vld [vmem:[%s706] sm:$0xff]
        %v708 = vsel %vm415, %v698, 0
        %710 = vmatpush.msra.mxu0 0.0
        %711 = vmatpush.msra.mxu0 0.0
        %712 = vmatpush.msra.mxu0 0.0
        %713 = vmatpush.msra.mxu0 0.0
        %714 = vmatpush.msra.mxu0 0.0
        %715 = vmatpush.msra.mxu0 0.0
        %716 = vmatpush.msra.mxu0 0.0
        %717 = vmatpush.msra.mxu0 0.0
        %718 = vmatpush.msra.mxu0 0.0
        %719 = vmatpush.msra.mxu0 0.0
        %720 = vmatpush.msra.mxu0 0.0
        %721 = vmatpush.msra.mxu0 0.0
        %722 = vmatpush.msra.mxu0 %v409
        %723 = vmatpush.msra.mxu0 %v408
        %724 = vmatpush.msra.mxu0 %v407
        %725 = vmatpush.msra.mxu0 %v406
        %726 = vmatmul.f32.gmra.mxu0 %v708
        %v727 = vpop.f32.mrf.mxu0
        %v728 = vadd.f32 0.0, %v727
        %729 = vdwg.mxu0
        %v730 = vadd.f32 %v707, %v728
        %v731 = vxor.u32 %v730, 2147483648
        %v732 = vmul.f32 %v731, 1.442695
        %v733 = vpow.pop %v732
        %v734 = vadd.f32 %v733, 1.0
        %v735 = vrcp.pop %v734
        %v736 = vmul.f32 %v734, %v735
        %v737 = vsub.f32 1.0, %v736
        %v738 = vmul.f32 %v735, %v737
        %v739 = vadd.f32 %v735, %v738
        %vm740 = vweird.f32 %v734
        %vm741 = vweird.f32 %v735
        %vm742 = vmor %vm740, %vm741
        %v743 = vsel %vm742, %v735, %v739
        %v744 = vand.u32 2147483647, %v734
        %vm745 = vcmp.eq.f32.partialorder %v744, 8.507059e+37
        %v746 = vand.u32 %v734, 2147483648
        %v747 = vor.u32 1.1754944e-38, %v746
        %v748 = vsel %vm745, %v747, %v743
        %v749 = vmul.f32 1.0, %v748
        %v750 = vtanh.pop %v730
        %v751 = vmul.f32 %v749, %v689
        %753 = vrot.lane.b32.xlu0 %v750, 64
        %v754 = vpop.permute.xlu0 %753
        %v756 = vmul.f32 %v749, %v754
        %758 = vrot.lane.b32.xlu0 %v756, 32
        %v759 = vpop.permute.xlu0 %758
        %v761 = vadd.f32 %v751, %v759
        %v762 = vtanh.pop %v761
        %764 = vrot.lane.b32.xlu0 %v762, 64
        %v765 = vpop.permute.xlu0 %764
        %v767 = vmul.f32 %v749, %v765
        %769 = vrot.lane.b32.xlu0 %v767, 32
        %v770 = vpop.permute.xlu0 %769
        %s772 = scalar_lea.vmem [#allocation3], %s705
        %773 = vst.msk [vmem:[%s772] sm:$0xff] %vm415, %v770
        %s774 = smul.u32 %s304, 5
        %s775 = smul.u32 %s26, 2
        %s776 = sadd.s32 %s774, %s775
        %s777 = smul.u32 %s776, 8
        %s778 = scalar_lea.vmem [#allocation2], %s777
        %v779 = vld [vmem:[%s778] sm:$0xff]
        %v780 = vsel %vm415, %v770, 0
        %782 = vmatpush.msra.mxu0 0.0
        %783 = vmatpush.msra.mxu0 0.0
        %784 = vmatpush.msra.mxu0 0.0
        %785 = vmatpush.msra.mxu0 0.0
        %786 = vmatpush.msra.mxu0 0.0
        %787 = vmatpush.msra.mxu0 0.0
        %788 = vmatpush.msra.mxu0 0.0
        %789 = vmatpush.msra.mxu0 0.0
        %790 = vmatpush.msra.mxu0 0.0
        %791 = vmatpush.msra.mxu0 0.0
        %792 = vmatpush.msra.mxu0 0.0
        %793 = vmatpush.msra.mxu0 0.0
        %794 = vmatpush.msra.mxu0 %v409
        %795 = vmatpush.msra.mxu0 %v408
        %796 = vmatpush.msra.mxu0 %v407
        %797 = vmatpush.msra.mxu0 %v406
        %798 = vmatmul.f32.gmra.mxu0 %v780
        %v799 = vpop.f32.mrf.mxu0
        %v800 = vadd.f32 0.0, %v799
        %801 = vdwg.mxu0
        %v802 = vadd.f32 %v779, %v800
        %v803 = vxor.u32 %v802, 2147483648
        %v804 = vmul.f32 %v803, 1.442695
        %v805 = vpow.pop %v804
        %v806 = vadd.f32 %v805, 1.0
        %v807 = vrcp.pop %v806
        %v808 = vmul.f32 %v806, %v807
        %v809 = vsub.f32 1.0, %v808
        %v810 = vmul.f32 %v807, %v809
        %v811 = vadd.f32 %v807, %v810
        %vm812 = vweird.f32 %v806
        %vm813 = vweird.f32 %v807
        %vm814 = vmor %vm812, %vm813
        %v815 = vsel %vm814, %v807, %v811
        %v816 = vand.u32 2147483647, %v806
        %vm817 = vcmp.eq.f32.partialorder %v816, 8.507059e+37
        %v818 = vand.u32 %v806, 2147483648
        %v819 = vor.u32 1.1754944e-38, %v818
        %v820 = vsel %vm817, %v819, %v815
        %v821 = vmul.f32 1.0, %v820
        %v822 = vtanh.pop %v802
        %v823 = vmul.f32 %v821, %v761
        %825 = vrot.lane.b32.xlu0 %v822, 64
        %v826 = vpop.permute.xlu0 %825
        %v828 = vmul.f32 %v821, %v826
        %830 = vrot.lane.b32.xlu0 %v828, 32
        %v831 = vpop.permute.xlu0 %830
        %v833 = vadd.f32 %v823, %v831
        %v834 = vtanh.pop %v833
        %836 = vrot.lane.b32.xlu0 %v834, 64
        %v837 = vpop.permute.xlu0 %836
        %v839 = vmul.f32 %v821, %v837
        %841 = vrot.lane.b32.xlu0 %v839, 32
        %v842 = vpop.permute.xlu0 %841
        %s844 = scalar_lea.vmem [#allocation3], %s777
        %845 = vst.msk [vmem:[%s844] sm:$0xff] %vm415, %v842
        %s846 = smul.u32 %s304, 6
        %s847 = sadd.s32 %s846, %s26
        %s848 = smul.u32 %s847, 8
        %s849 = scalar_lea.vmem [#allocation2], %s848
        %v850 = vld [vmem:[%s849] sm:$0xff]
        %v851 = vsel %vm415, %v842, 0
        %853 = vmatpush.msra.mxu0 0.0
        %854 = vmatpush.msra.mxu0 0.0
        %855 = vmatpush.msra.mxu0 0.0
        %856 = vmatpush.msra.mxu0 0.0
        %857 = vmatpush.msra.mxu0 0.0
        %858 = vmatpush.msra.mxu0 0.0
        %859 = vmatpush.msra.mxu0 0.0
        %860 = vmatpush.msra.mxu0 0.0
        %861 = vmatpush.msra.mxu0 0.0
        %862 = vmatpush.msra.mxu0 0.0
        %863 = vmatpush.msra.mxu0 0.0
        %864 = vmatpush.msra.mxu0 0.0
        %865 = vmatpush.msra.mxu0 %v409
        %866 = vmatpush.msra.mxu0 %v408
        %867 = vmatpush.msra.mxu0 %v407
        %868 = vmatpush.msra.mxu0 %v406
        %869 = vmatmul.f32.gmra.mxu0 %v851
        %v870 = vpop.f32.mrf.mxu0
        %v871 = vadd.f32 0.0, %v870
        %872 = vdwg.mxu0
        %v873 = vadd.f32 %v850, %v871
        %v874 = vxor.u32 %v873, 2147483648
        %v875 = vmul.f32 %v874, 1.442695
        %v876 = vpow.pop %v875
        %v877 = vadd.f32 %v876, 1.0
        %v878 = vrcp.pop %v877
        %v879 = vmul.f32 %v877, %v878
        %v880 = vsub.f32 1.0, %v879
        %v881 = vmul.f32 %v878, %v880
        %v882 = vadd.f32 %v878, %v881
        %vm883 = vweird.f32 %v877
        %vm884 = vweird.f32 %v878
        %vm885 = vmor %vm883, %vm884
        %v886 = vsel %vm885, %v878, %v882
        %v887 = vand.u32 2147483647, %v877
        %vm888 = vcmp.eq.f32.partialorder %v887, 8.507059e+37
        %v889 = vand.u32 %v877, 2147483648
        %v890 = vor.u32 1.1754944e-38, %v889
        %v891 = vsel %vm888, %v890, %v886
        %v892 = vmul.f32 1.0, %v891
        %v893 = vtanh.pop %v873
        %v894 = vmul.f32 %v892, %v833
        %896 = vrot.lane.b32.xlu0 %v893, 64
        %v897 = vpop.permute.xlu0 %896
        %v899 = vmul.f32 %v892, %v897
        %901 = vrot.lane.b32.xlu0 %v899, 32
        %v902 = vpop.permute.xlu0 %901
        %v904 = vadd.f32 %v894, %v902
        %v905 = vtanh.pop %v904
        %907 = vrot.lane.b32.xlu0 %v905, 64
        %v908 = vpop.permute.xlu0 %907
        %v910 = vmul.f32 %v892, %v908
        %912 = vrot.lane.b32.xlu0 %v910, 32
        %v913 = vpop.permute.xlu0 %912
        %s915 = scalar_lea.vmem [#allocation3], %s848
        %916 = vst.msk [vmem:[%s915] sm:$0xff] %vm415, %v913
        %s917 = smul.u32 %s304, 56
        %s918 = scalar_lea.vmem [#allocation2], %s917
        %v919 = vld [vmem:[%s918] sm:$0xff]
        %v920 = vsel %vm415, %v913, 0
        %922 = vmatpush.msra.mxu0 0.0
        %923 = vmatpush.msra.mxu0 0.0
        %924 = vmatpush.msra.mxu0 0.0
        %925 = vmatpush.msra.mxu0 0.0
        %926 = vmatpush.msra.mxu0 0.0
        %927 = vmatpush.msra.mxu0 0.0
        %928 = vmatpush.msra.mxu0 0.0
        %929 = vmatpush.msra.mxu0 0.0
        %930 = vmatpush.msra.mxu0 0.0
        %931 = vmatpush.msra.mxu0 0.0
        %932 = vmatpush.msra.mxu0 0.0
        %933 = vmatpush.msra.mxu0 0.0
        %934 = vmatpush.msra.mxu0 %v409
        %935 = vmatpush.msra.mxu0 %v408
        %936 = vmatpush.msra.mxu0 %v407
        %937 = vmatpush.msra.mxu0 %v406
        %938 = vmatmul.f32.gmra.mxu0 %v920
        %v939 = vpop.f32.mrf.mxu0
        %v940 = vadd.f32 0.0, %v939
        %941 = vdwg.mxu0
        %v942 = vadd.f32 %v919, %v940
        %v943 = vxor.u32 %v942, 2147483648
        %v944 = vmul.f32 %v943, 1.442695
        %v945 = vpow.pop %v944
        %v946 = vadd.f32 %v945, 1.0
        %v947 = vrcp.pop %v946
        %v948 = vmul.f32 %v946, %v947
        %v949 = vsub.f32 1.0, %v948
        %v950 = vmul.f32 %v947, %v949
        %v951 = vadd.f32 %v947, %v950
        %vm952 = vweird.f32 %v946
        %vm953 = vweird.f32 %v947
        %vm954 = vmor %vm952, %vm953
        %v955 = vsel %vm954, %v947, %v951
        %v956 = vand.u32 2147483647, %v946
        %vm957 = vcmp.eq.f32.partialorder %v956, 8.507059e+37
        %v958 = vand.u32 %v946, 2147483648
        %v959 = vor.u32 1.1754944e-38, %v958
        %v960 = vsel %vm957, %v959, %v955
        %v961 = vmul.f32 1.0, %v960
        %v962 = vtanh.pop %v942
        %v963 = vmul.f32 %v961, %v904
        %965 = vrot.lane.b32.xlu0 %v962, 64
        %v966 = vpop.permute.xlu0 %965
        %v968 = vmul.f32 %v961, %v966
        %970 = vrot.lane.b32.xlu0 %v968, 32
        %v971 = vpop.permute.xlu0 %970
        %v973 = vadd.f32 %v963, %v971
        %v974 = vtanh.pop %v973
        %976 = vrot.lane.b32.xlu0 %v974, 64
        %v977 = vpop.permute.xlu0 %976
        %v979 = vmul.f32 %v961, %v977
        %981 = vrot.lane.b32.xlu0 %v979, 32
        %v982 = vpop.permute.xlu0 %981
        %s984 = scalar_lea.vmem [#allocation3], %s917
        %985 = vst.msk [vmem:[%s984] sm:$0xff] %vm415, %v982
        %986 = vst.msk [vmem:[#allocation4] sm:$0xff] %vm415, %v982
        %988 = vrot.lane.b32.xlu0 %v973, 96
        %v989 = vpop.permute.xlu0 %988
        %991 = vst.msk [vmem:[#allocation5] sm:$0xff] %vm415, %v989
        %v992 = vld [vmem:[%s303] sm:$0x1]
        %v993 = vld [vmem:[#allocation3] sm:$0xff]
        %v994 = vld [vmem:[#allocation3 + $0x8] sm:$0xff]
        %v995 = vld [vmem:[#allocation3 + $0x10] sm:$0xff]
        %v996 = vld [vmem:[#allocation3 + $0x18] sm:$0xff]
        %v997 = vld [vmem:[#allocation3 + $0x20] sm:$0xff]
        %v998 = vld [vmem:[#allocation3 + $0x28] sm:$0xff]
        %v999 = vld [vmem:[#allocation3 + $0x30] sm:$0xff]
        %v1000 = vld [vmem:[#allocation3 + $0x38] sm:$0xff]
        %v1002 = vsel %vm415, %v992, 0
        %v1005 = vsel %vm415, %v993, 0
        %v1008 = vsel %vm415, %v994, 0
        %v1011 = vsel %vm415, %v995, 0
        %v1014 = vsel %vm415, %v996, 0
        %v1017 = vsel %vm415, %v997, 0
        %v1020 = vsel %vm415, %v998, 0
        %v1023 = vsel %vm415, %v999, 0
        %v1026 = vsel %vm415, %v1000, 0
        %1028 = vmatpush.xpose.msra.mxu0 0.0
        %1029 = vmatpush.xpose.msra.mxu0 0.0
        %1030 = vmatpush.xpose.msra.mxu0 0.0
        %1031 = vmatpush.xpose.msra.mxu0 0.0
        %1032 = vmatpush.xpose.msra.mxu0 0.0
        %1033 = vmatpush.xpose.msra.mxu0 0.0
        %1034 = vmatpush.xpose.msra.mxu0 0.0
        %1035 = vmatpush.xpose.msra.mxu0 0.0
        %1036 = vmatpush.xpose.msra.mxu0 %v1026
        %1037 = vmatpush.xpose.msra.mxu0 %v1023
        %1038 = vmatpush.xpose.msra.mxu0 %v1020
        %1039 = vmatpush.xpose.msra.mxu0 %v1017
        %1040 = vmatpush.xpose.msra.mxu0 %v1014
        %1041 = vmatpush.xpose.msra.mxu0 %v1011
        %1042 = vmatpush.xpose.msra.mxu0 %v1008
        %1043 = vmatpush.xpose.msra.mxu0 %v1005
        %1044 = vmatmul.f32.gmra.mxu0 %v1002
        %v1045 = vpop.f32.mrf.mxu0
        %v1046 = vadd.f32 0.0, %v1045
        %1047 = vdwg.mxu0
        %s1048 = scalar_lea.vmem %s292, %s308 [#allocation9]
        %vm1049 = vcmask 516096
        %1050 = vst.msk [vmem:[%s1048] sm:$0x1] %vm1049, %v1046
        %s1051 = sand.u32 %s167, 1
        %s1052 = scalar_lea.sflag [#allocation8], %s1051
        %s1053 = sand.u32 %s167, 1
        %s1054 = scalar_lea.vmem [#allocation9], %s1053
        // Predicated region
        $region49: #{tpu_custom_call.1} parent=39 // pred_check
          %p1055 = pneg %p177
        $region50: #{tpu_custom_call.1} parent=39 // pred_check_branch
          %1057 = sbr.rel (%p1055) target = $region52
        $region51: #{tpu_custom_call.1} parent=39 // pred_region
          %1059 = vsyncadd %s1052, 0
          %s1060 = scalar_lea.hbm %s5, %s26
          %s1062 = sshll.u32 %s1054, 4
          %s1063 = int_to_ptr.vmem [resolvable:$true] %s1062
          %s1064 = sshll.u32 %s1060, 4
          %s1065 = int_to_ptr.hbm [resolvable:$true] %s1064
          %1067 = dma.vmem_to_hbm [thread:$0]  %s1063, 16, %s1065, %s1052
        $region52: #{tpu_custom_call.1} parent=39 // pred_fallthru
          _
      $region40: #{tpu_custom_call.1} parent=5 // pred_fallthru
        _
      %p1068 = scmp.le.s32.totalorder 2, %s17
      // Predicated region
      $region53: #{tpu_custom_call.1} parent=5 // pred_check
        %p1069 = pneg %p1068
      $region54: #{tpu_custom_call.1} parent=5 // pred_check_branch
        %1071 = sbr.rel (%p1069) target = $region56
      $region55: #{tpu_custom_call.1} parent=5 // pred_region
        %s1072 = ssub.s32 %s17, 2
        // Predicated region
        $region57: #{tpu_custom_call.1} parent=55 // pred_check
          %p1073 = pneg %p183
        $region58: #{tpu_custom_call.1} parent=55 // pred_check_branch
          %1075 = sbr.rel (%p1073) target = $region60
        $region59: #{tpu_custom_call.1} parent=55 // pred_region
          %s1076 = sand.u32 %s168, 1
          %s1077 = scalar_lea.sflag [#allocation8], %s1076
          %s1078 = sand.u32 %s168, 1
          %s1079 = scalar_lea.vmem [#allocation9], %s1078
          %1081 = dma.done %s1077, 16
        $region60: #{tpu_custom_call.1} parent=55 // pred_fallthru
          _
      $region56: #{tpu_custom_call.1} parent=5 // pred_fallthru
        _
    $region6: #{tpu_custom_call.1} parent=1 // loop_footer
      %s21 = sadd.s32 1, %s17
    $region7: #{tpu_custom_call.1} parent=1 // loop_footer_branch
      %16 = sbr.rel target = $region3
    $region8: #{tpu_custom_call.1} parent=1 // loop_exit
      _
    %1082 = vsyncpa [#allocation7], 1
    %s1083 = scalar_lea.sflag [#allocation7], 1
    %1084 = vsyncpa %s1083, 1
    %1085 = vsyncpa [#allocation8], 1
    %s1086 = scalar_lea.sflag [#allocation8], 1
    %1087 = vsyncpa %s1086, 1

</llo_original>
